<compile_context>
chip_gen: v6e
topology: v6e:2x2x1
jax: 0.10.0
libtpu: 0.0.40
codegen_flags: <defaults>
</compile_context>

<pallas_src>
import functools
import math

import jax
import jax.numpy as jnp
from jax import lax
from jax.experimental import pallas as pl
from jax.experimental.pallas import tpu as pltpu

LN_EPS = 1e-5  # PyTorch LayerNorm default eps


# ----------------------------- helpers --------------------------------------

def _detect_weight_pipeline_mode():
    """Probe whether pipeline_mode=pl.Buffered(1) (single-buffered resident
    weights) is supported by this JAX/Pallas build; fall back silently."""
    try:
        mode = pl.Buffered(1)

        def _probe(w_ref, x_ref, o_ref):
            o_ref[...] = x_ref[...] + w_ref[...]

        out = pl.pallas_call(
            _probe,
            out_shape=jax.ShapeDtypeStruct((16, 128), jnp.float32),
            grid=(2,),
            in_specs=[pl.BlockSpec((8, 128), lambda i: (0, 0), pipeline_mode=mode),
                      pl.BlockSpec((8, 128), lambda i: (i, 0))],
            out_specs=pl.BlockSpec((8, 128), lambda i: (i, 0)),
        )(jnp.ones((8, 128), jnp.float32), jnp.ones((16, 128), jnp.float32))
        jax.block_until_ready(out)
        if not bool(jnp.allclose(out, 2.0)):
            return None
        return mode
    except Exception:
        return None


_WEIGHT_PIPELINE_MODE = _detect_weight_pipeline_mode()


def _const_spec(shape):
    """BlockSpec for a weight with a constant index map (fully resident);
    single-buffered when supported to avoid duplicating weight slabs in VMEM."""
    index_map = lambda *_: (0,) * len(shape)
    if _WEIGHT_PIPELINE_MODE is not None:
        try:
            return pl.BlockSpec(shape, index_map,
                                pipeline_mode=_WEIGHT_PIPELINE_MODE)
        except TypeError:
            pass
    return pl.BlockSpec(shape, index_map)


def _mosaic_params(semantics, live_bytes):
    # live bytes + ~25% headroom, clamped to [32 MiB, 100 MiB]
    limit = int(min(100 * (1 << 20),
                    max(32 * (1 << 20), int(live_bytes * 1.25) + (2 << 20))))
    return pltpu.CompilerParams(dimension_semantics=semantics,
                                vmem_limit_bytes=limit)


def _layernorm(z, g, b):
    # f32 statistics, biased variance (matches PyTorch)
    mu = jnp.mean(z, axis=-1, keepdims=True)
    var = jnp.mean((z - mu) ** 2, axis=-1, keepdims=True)
    return (z - mu) * lax.rsqrt(var + LN_EPS) * g + b


# ----------------------------- kernels --------------------------------------

def attn_block_kernel(xq_ref, xs_ref, wq_ref, bq_ref, wk_ref, bk_ref,
                      wv_ref, bv_ref, wo_ref, bo_ref, g_ref, b_ref,
                      o_ref, acc_ref, *, scale):
    """One (batch, query-tile, head) grid step.

    xq_ref : (TQ, D) bf16 query rows for this tile
    xs_ref : (S, D)  bf16 full sequence for this batch element (K/V source)
    w*_ref : this head's projection weights (bf16); b*_ref: biases (f32)
    acc_ref: (TQ, D) f32 accumulator of per-head output-projection terms
    """
    head = pl.program_id(2)
    n_heads = pl.num_programs(2)

    @pl.when(head == 0)
    def _():
        acc_ref[...] = jnp.zeros_like(acc_ref)

    xq = xq_ref[...]                                           # (TQ, D) bf16
    xs = xs_ref[...]                                           # (S, D)  bf16
    wq, wk, wv, wo = wq_ref[...], wk_ref[...], wv_ref[...], wo_ref[...]

    # per-head projections (bf16 MXU operands, f32 accumulation)
    q = jnp.dot(xq, wq, preferred_element_type=jnp.float32) + bq_ref[...]
    k = jnp.dot(xs, wk, preferred_element_type=jnp.float32) + bk_ref[...]
    v = jnp.dot(xs, wv, preferred_element_type=jnp.float32) + bv_ref[...]

    qb = (q * scale).astype(xq.dtype)
    kb = k.astype(xq.dtype)
    # scores: (TQ, S) -- contraction over the head dim without transposing K
    # TODO(synk): pack multiple heads per matmul when dh < 128 to fill the MXU.
    s = lax.dot_general(qb, kb, (((1,), (1,)), ((), ())),
                        preferred_element_type=jnp.float32)
    # TODO(synk): attention-mask path (forward is exercised with mask=None).
    s = s - jnp.max(s, axis=-1, keepdims=True)
    p = jnp.exp(s)
    p = p * pl.reciprocal(jnp.sum(p, axis=-1, keepdims=True), approx=True)
    o_h = jnp.dot(p.astype(xq.dtype), v.astype(xq.dtype),
                  preferred_element_type=jnp.float32)          # (TQ, dh)

    # accumulate this head's output-projection contribution (lane-dense (TQ, D))
    acc_ref[...] += jnp.dot(o_h.astype(wo.dtype), wo,
                            preferred_element_type=jnp.float32)

    @pl.when(head == n_heads - 1)
    def _():
        z = xq.astype(jnp.float32) + acc_ref[...] + bo_ref[...]
        o_ref[...] = _layernorm(z, g_ref[...], b_ref[...]).astype(o_ref.dtype)


def ffn_block_kernel(x_ref, w1_ref, b1_ref, w2_ref, b2_ref, g_ref, b_ref, o_ref):
    """Row tile per grid step. x_ref/o_ref: (TM, D) bf16; 4D hidden stays in VMEM."""
    x = x_ref[...]                                             # (TM, D) bf16
    w1, w2 = w1_ref[...], w2_ref[...]
    h = jnp.dot(x, w1, preferred_element_type=jnp.float32) + b1_ref[...]
    h = jnp.maximum(h, 0.0)
    y = jnp.dot(h.astype(w2.dtype), w2,
                preferred_element_type=jnp.float32) + b2_ref[...]
    z = x.astype(jnp.float32) + y
    o_ref[...] = _layernorm(z, g_ref[...], b_ref[...]).astype(o_ref.dtype)


def pool_classifier_kernel(x_ref, w1_ref, b1_ref, w2_ref, b2_ref, w3_ref, b3_ref,
                           o_ref, acc_ref, *, seq_len, ts):
    """Accumulate the seq-sum over a tiled S axis; run the MLP at the last step."""
    si = pl.program_id(1)
    ns = pl.num_programs(1)

    @pl.when(si == 0)
    def _():
        acc_ref[...] = jnp.zeros_like(acc_ref)

    x = x_ref[...].astype(jnp.float32)                         # (TB, TS, D)
    pos = si * ts + lax.broadcasted_iota(jnp.int32, (1, ts, 1), 1)
    x = jnp.where(pos < seq_len, x, 0.0)                       # mask ragged S tile
    acc_ref[...] += jnp.sum(x, axis=1)                         # (TB, D)

    @pl.when(si == ns - 1)
    def _():
        pooled = acc_ref[...] * (1.0 / seq_len)
        h = jnp.dot(pooled, w1_ref[...],
                    preferred_element_type=jnp.float32) + b1_ref[...]
        h = jnp.maximum(h, 0.0)
        h = jnp.dot(h, w2_ref[...],
                    preferred_element_type=jnp.float32) + b2_ref[...]
        h = jnp.maximum(h, 0.0)
        h = jnp.dot(h, w3_ref[...],
                    preferred_element_type=jnp.float32) + b3_ref[...]
        # TODO(synk): the (TB, 1) store is a masked lane-width-1 vst; negligible here.
        o_ref[...] = jax.nn.sigmoid(h).astype(o_ref.dtype)


# --------------------------- pallas wrappers ---------------------------------

def attention_block(x, wq, bq, wk, bk, wv, bv, wo, bo, g, b, *, n_heads, tq=256):
    """Fused QKV projection + MHA + out-projection + residual + LayerNorm."""
    B, S, D = x.shape
    dh = D // n_heads
    TQ = min(tq, S)
    nq = pl.cdiv(S, TQ)
    scale = 1.0 / math.sqrt(dh)

    xq_spec = pl.BlockSpec((None, TQ, D), lambda bi, qi, hi: (bi, qi, 0))
    xs_spec = pl.BlockSpec((None, S, D), lambda bi, qi, hi: (bi, 0, 0))
    out_spec = pl.BlockSpec((None, TQ, D), lambda bi, qi, hi: (bi, qi, 0))
    head_w = lambda shp: pl.BlockSpec((None,) + shp, lambda bi, qi, hi: (hi, 0, 0))

    itemsize = x.dtype.itemsize
    live_bytes = (
        2 * S * D * itemsize                 # xs, double-buffered
        + 2 * 2 * TQ * D * itemsize          # xq + out tiles, double-buffered
        + 2 * 4 * D * dh * 2                 # per-head weights (4 mats, bf16), x2 buffers
        + TQ * D * 4                         # accumulator scratch (f32)
        + (TQ + 2 * S) * dh * 4              # q, k, v (f32)
        + 2 * TQ * S * 4                     # scores + probs (f32)
        + 3 * TQ * D * 4                     # residual / LayerNorm temporaries
    )

    # TODO(synk): flash-style K/V tiling (online softmax over an extra kv axis)
    #             for very long S where the (TQ, S) scores / (S, D) sequence
    #             exceed v7x's 64 MiB VMEM; K/V projections are also recomputed
    #             per query tile when S > TQ.
    return pl.pallas_call(
        functools.partial(attn_block_kernel, scale=scale),
        out_shape=jax.ShapeDtypeStruct((B, S, D), x.dtype),
        grid=(B, nq, n_heads),
        in_specs=[xq_spec, xs_spec,
                  head_w((D, dh)), head_w((1, dh)),
                  head_w((D, dh)), head_w((1, dh)),
                  head_w((D, dh)), head_w((1, dh)),
                  head_w((dh, D)),
                  _const_spec(bo.shape), _const_spec(g.shape), _const_spec(b.shape)],
        out_specs=out_spec,
        scratch_shapes=[pltpu.VMEM((TQ, D), jnp.float32)],
        compiler_params=_mosaic_params(("parallel", "parallel", "arbitrary"),
                                       live_bytes),
    )(x, x, wq, bq, wk, bk, wv, bv, wo, bo, g, b)


def ffn_block(x2, w1, b1, w2, b2, g, b, *, tm=256):
    """Fused linear1 + ReLU + linear2 + residual + LayerNorm, row-tiled over B*S."""
    N, D = x2.shape
    H4 = w1.shape[1]
    TM = min(tm, N)
    itemsize = x2.dtype.itemsize
    wbuf = 1 if _WEIGHT_PIPELINE_MODE is not None else 2
    live_bytes = (
        wbuf * (D * H4 + H4 * D) * 2         # bf16 weights
        + 2 * 2 * TM * D * itemsize          # x + out tiles, double-buffered
        + TM * H4 * 4                        # hidden (f32)
        + 3 * TM * D * 4                     # residual / LN temporaries
    )
    xy_spec = pl.BlockSpec((TM, D), lambda i: (i, 0))
    return pl.pallas_call(
        ffn_block_kernel,
        out_shape=jax.ShapeDtypeStruct((N, D), x2.dtype),
        grid=(pl.cdiv(N, TM),),
        in_specs=[xy_spec,
                  _const_spec(w1.shape), _const_spec(b1.shape),
                  _const_spec(w2.shape), _const_spec(b2.shape),
                  _const_spec(g.shape), _const_spec(b.shape)],
        out_specs=xy_spec,
        compiler_params=_mosaic_params(("parallel",), live_bytes),
    )(x2, w1, b1, w2, b2, g, b)


def pallas_pool_classifier(x, w1, b1, w2, b2, w3, b3, *, tb=8, ts=512):
    """mean over seq (tiled, accumulated in VMEM) + 3-layer MLP + sigmoid."""
    B, S, D = x.shape
    TB = B if B <= tb else tb
    TS = min(ts, S)
    itemsize = x.dtype.itemsize
    live_bytes = (
        2 * TB * TS * D * itemsize           # x tiles, double-buffered
        + TB * TS * D * 4                    # f32 copy of the tile
        + TB * D * 4                         # pooled accumulator
        + 4 * (D * w1.shape[1] + w1.shape[1] * w2.shape[1] + w2.shape[1])  # MLP weights
    )
    return pl.pallas_call(
        functools.partial(pool_classifier_kernel, seq_len=S, ts=TS),
        out_shape=jax.ShapeDtypeStruct((B, 1), jnp.float32),
        grid=(pl.cdiv(B, TB), pl.cdiv(S, TS)),
        in_specs=[pl.BlockSpec((TB, TS, D), lambda bi, si: (bi, si, 0)),
                  _const_spec(w1.shape), _const_spec(b1.shape),
                  _const_spec(w2.shape), _const_spec(b2.shape),
                  _const_spec(w3.shape), _const_spec(b3.shape)],
        out_specs=pl.BlockSpec((TB, 1), lambda bi, si: (bi, 0)),
        scratch_shapes=[pltpu.VMEM((TB, D), jnp.float32)],
        compiler_params=_mosaic_params(("parallel", "arbitrary"), live_bytes),
    )(x, w1, b1, w2, b2, w3, b3)


# --------------------------- model (glue in JAX) -----------------------------

def init_params(key, feature_dim, n_heads, n_layers):
    """Deterministic synthetic init. MXU operand weights are bf16 and stored
    head-major for attention ((H, D, dh) / (H, dh, D)); biases, LayerNorm and
    classifier params stay f32."""
    D = feature_dim
    dh = D // n_heads

    def w(k, shp, dtype=jnp.bfloat16):
        return (jax.random.normal(k, shp, jnp.float32) * 0.05).astype(dtype)

    layers = []
    for _ in range(n_layers):
        keys = jax.random.split(key, 7)
        key = keys[0]
        layers.append(dict(
            wq=w(keys[1], (n_heads, D, dh)), bq=jnp.zeros((n_heads, 1, dh), jnp.float32),
            wk=w(keys[2], (n_heads, D, dh)), bk=jnp.zeros((n_heads, 1, dh), jnp.float32),
            wv=w(keys[3], (n_heads, D, dh)), bv=jnp.zeros((n_heads, 1, dh), jnp.float32),
            wo=w(keys[4], (n_heads, dh, D)), bo=jnp.zeros((1, D), jnp.float32),
            ln1_g=jnp.ones((1, D), jnp.float32), ln1_b=jnp.zeros((1, D), jnp.float32),
            w1=w(keys[5], (D, 4 * D)), b1=jnp.zeros((1, 4 * D), jnp.float32),
            w2=w(keys[6], (4 * D, D)), b2=jnp.zeros((1, D), jnp.float32),
            ln2_g=jnp.ones((1, D), jnp.float32), ln2_b=jnp.zeros((1, D), jnp.float32),
        ))
    kc = jax.random.split(key, 3)
    clf = dict(
        w1=jax.random.normal(kc[0], (D, D // 2), jnp.float32) * 0.05,
        b1=jnp.zeros((1, D // 2), jnp.float32),
        w2=jax.random.normal(kc[1], (D // 2, D // 4), jnp.float32) * 0.05,
        b2=jnp.zeros((1, D // 4), jnp.float32),
        w3=jax.random.normal(kc[2], (D // 4, 1), jnp.float32) * 0.05,
        b3=jnp.zeros((1, 1), jnp.float32),
    )
    return dict(layers=layers, clf=clf)


def v2i_transformer_encoder(params, x, *, n_heads):
    """x: (B, S, D) -> threat probabilities (B, 1). mask=None path only.
    Inference semantics: dropout == identity; post-norm TransformerEncoderLayer."""
    B, S, D = x.shape
    h = x.astype(jnp.bfloat16)        # inter-layer activations carried in bf16
    for p in params['layers']:
        # fused: QKV proj + multi-head attention + out proj + residual + LN1
        h = attention_block(h, p['wq'], p['bq'], p['wk'], p['bk'],
                            p['wv'], p['bv'], p['wo'], p['bo'],
                            p['ln1_g'], p['ln1_b'], n_heads=n_heads)
        # fused: linear1 + ReLU + linear2 + residual + LN2 (row-tiled over B*S)
        h2 = ffn_block(h.reshape(B * S, D), p['w1'], p['b1'], p['w2'], p['b2'],
                       p['ln2_g'], p['ln2_b'])
        h = h2.reshape(B, S, D)
    c = params['clf']
    return pallas_pool_classifier(h, c['w1'], c['b1'], c['w2'], c['b2'],
                                  c['w3'], c['b3'])


if __name__ == "__main__":
    # small shapes consistent with the module: (B, S, D) with D divisible by n_heads
    B, S, D, H, L = 2, 8, 32, 8, 2
    key = jax.random.PRNGKey(0)
    kx, kp = jax.random.split(key)
    x = jax.random.normal(kx, (B, S, D), jnp.float32)
    params = init_params(kp, D, H, L)

    fwd = jax.jit(functools.partial(v2i_transformer_encoder, n_heads=H))
    out = jax.block_until_ready(fwd(params, x))

    assert out.shape == (B, 1)
    assert bool(jnp.all((out >= 0.0) & (out <= 1.0)))
    print("KERNEL_OK")
</pallas_src>

<mosaic_0001>
module attributes {stable_mosaic.version = 11 : i64} {
  func.func @_probe(%arg0: i32, %arg1: memref<8x128xf32, #tpu.memory_space<vmem>>, %arg2: memref<8x128xf32, #tpu.memory_space<vmem>>, %arg3: memref<8x128xf32, #tpu.memory_space<vmem>>) attributes {dimension_semantics = [#tpu.dimension_semantics<arbitrary>], iteration_bounds = array<i64: 2>, scalar_prefetch = 0 : i64, scratch_operands = 0 : i64, tpu.core_type = #tpu.core_type<tc>, window_params = [{pipeline_mode = #tpu.pipeline_mode<synchronous>, transform_indices = @transform_0, window_bounds = array<i64: 8, 128>}, {transform_indices = @transform_1, window_bounds = array<i64: 8, 128>}, {transform_indices = @transform_2, window_bounds = array<i64: 8, 128>}]} {
    %c0 = arith.constant 0 : index
    %c0_0 = arith.constant 0 : index
    %0 = vector.load %arg2[%c0, %c0_0] : memref<8x128xf32, #tpu.memory_space<vmem>>, vector<8x128xf32>
    %c0_1 = arith.constant 0 : index
    %c0_2 = arith.constant 0 : index
    %1 = vector.load %arg1[%c0_1, %c0_2] : memref<8x128xf32, #tpu.memory_space<vmem>>, vector<8x128xf32>
    %2 = arith.addf %0, %1 : vector<8x128xf32>
    %c0_3 = arith.constant 0 : index
    %c0_4 = arith.constant 0 : index
    %3 = vector.load %arg3[%c0_3, %c0_4] : memref<8x128xf32, #tpu.memory_space<vmem>>, vector<8x128xf32>
    tpu.vector_store %arg3[%c0_3, %c0_4], %2 {strides = array<i32>} : memref<8x128xf32, #tpu.memory_space<vmem>>, vector<8x128xf32>,
    return
  }
  func.func @transform_0(%arg0: i32) -> (i32, i32) {
    %c0_i32 = arith.constant 0 : i32
    %c0_i32_0 = arith.constant 0 : i32
    %c0_i32_1 = arith.constant 0 : i32
    return %c0_i32, %c0_i32_0 : i32, i32
  }
  func.func @transform_1(%arg0: i32) -> (i32, i32) {
    %c0_i32 = arith.constant 0 : i32
    %c0_i32_0 = arith.constant 0 : i32
    return %arg0, %c0_i32 : i32, i32
  }
  func.func @transform_2(%arg0: i32) -> (i32, i32) {
    %c0_i32 = arith.constant 0 : i32
    %c0_i32_0 = arith.constant 0 : i32
    return %arg0, %c0_i32 : i32, i32
  }
}

module attributes {stable_mosaic.version = 11 : i64} {
  func.func @attn_block_kernel(%arg0: i32, %arg1: i32, %arg2: i32, %arg3: memref<1x8x32xbf16, #tpu.memory_space<vmem>>, %arg4: memref<1x8x32xbf16, #tpu.memory_space<vmem>>, %arg5: memref<1x32x4xbf16, #tpu.memory_space<vmem>>, %arg6: memref<1x1x4xf32, #tpu.memory_space<vmem>>, %arg7: memref<1x32x4xbf16, #tpu.memory_space<vmem>>, %arg8: memref<1x1x4xf32, #tpu.memory_space<vmem>>, %arg9: memref<1x32x4xbf16, #tpu.memory_space<vmem>>, %arg10: memref<1x1x4xf32, #tpu.memory_space<vmem>>, %arg11: memref<1x4x32xbf16, #tpu.memory_space<vmem>>, %arg12: memref<1x32xf32, #tpu.memory_space<vmem>>, %arg13: memref<1x32xf32, #tpu.memory_space<vmem>>, %arg14: memref<1x32xf32, #tpu.memory_space<vmem>>, %arg15: memref<1x8x32xbf16, #tpu.memory_space<vmem>>, %arg16: memref<8x32xf32, #tpu.memory_space<vmem>>) attributes {dimension_semantics = [#tpu.dimension_semantics<parallel>, #tpu.dimension_semantics<parallel>, #tpu.dimension_semantics<arbitrary>], iteration_bounds = array<i64: 2, 1, 8>, scalar_prefetch = 0 : i64, scratch_operands = 1 : i64, tpu.core_type = #tpu.core_type<tc>, window_params = [{transform_indices = @transform_0, window_bounds = array<i64: 1, 8, 32>}, {transform_indices = @transform_1, window_bounds = array<i64: 1, 8, 32>}, {transform_indices = @transform_2, window_bounds = array<i64: 1, 32, 4>}, {transform_indices = @transform_3, window_bounds = array<i64: 1, 1, 4>}, {transform_indices = @transform_4, window_bounds = array<i64: 1, 32, 4>}, {transform_indices = @transform_5, window_bounds = array<i64: 1, 1, 4>}, {transform_indices = @transform_6, window_bounds = array<i64: 1, 32, 4>}, {transform_indices = @transform_7, window_bounds = array<i64: 1, 1, 4>}, {transform_indices = @transform_8, window_bounds = array<i64: 1, 4, 32>}, {pipeline_mode = #tpu.pipeline_mode<synchronous>, transform_indices = @transform_9, window_bounds = array<i64: 1, 32>}, {pipeline_mode = #tpu.pipeline_mode<synchronous>, transform_indices = @transform_10, window_bounds = array<i64: 1, 32>}, {pipeline_mode = #tpu.pipeline_mode<synchronous>, transform_indices = @transform_11, window_bounds = array<i64: 1, 32>}, {transform_indices = @transform_12, window_bounds = array<i64: 1, 8, 32>}]} {
    %c0_i32 = arith.constant 0 : i32
    %0 = arith.cmpi eq, %arg2, %c0_i32 : i32
    %1 = arith.extui %0 : i1 to i32
    %c0_i32_0 = arith.constant 0 : i32
    %2 = arith.cmpi ne, %1, %c0_i32_0 : i32
    scf.if %2 {
      %cst_40 = arith.constant 0.000000e+00 : f32
      %56 = vector.broadcast %cst_40 : f32 to vector<8x32xf32>
      %c0_41 = arith.constant 0 : index
      %c0_42 = arith.constant 0 : index
      %57 = vector.load %arg16[%c0_41, %c0_42] : memref<8x32xf32, #tpu.memory_space<vmem>>, vector<8x32xf32>
      tpu.vector_store %arg16[%c0_41, %c0_42], %56 {strides = array<i32>} : memref<8x32xf32, #tpu.memory_space<vmem>>, vector<8x32xf32>,
    } else {
    }
    %c0 = arith.constant 0 : index
    %c0_1 = arith.constant 0 : index
    %c0_2 = arith.constant 0 : index
    %3 = vector.load %arg3[%c0, %c0_1, %c0_2] : memref<1x8x32xbf16, #tpu.memory_space<vmem>>, vector<1x8x32xbf16>
    %4 = vector.shape_cast %3 : vector<1x8x32xbf16> to vector<8x32xbf16>
    %c0_3 = arith.constant 0 : index
    %c0_4 = arith.constant 0 : index
    %c0_5 = arith.constant 0 : index
    %5 = vector.load %arg4[%c0_3, %c0_4, %c0_5] : memref<1x8x32xbf16, #tpu.memory_space<vmem>>, vector<1x8x32xbf16>
    %6 = vector.shape_cast %5 : vector<1x8x32xbf16> to vector<8x32xbf16>
    %c0_6 = arith.constant 0 : index
    %c0_7 = arith.constant 0 : index
    %c0_8 = arith.constant 0 : index
    %7 = vector.load %arg5[%c0_6, %c0_7, %c0_8] : memref<1x32x4xbf16, #tpu.memory_space<vmem>>, vector<1x32x4xbf16>
    %8 = vector.shape_cast %7 : vector<1x32x4xbf16> to vector<32x4xbf16>
    %c0_9 = arith.constant 0 : index
    %c0_10 = arith.constant 0 : index
    %c0_11 = arith.constant 0 : index
    %9 = vector.load %arg7[%c0_9, %c0_10, %c0_11] : memref<1x32x4xbf16, #tpu.memory_space<vmem>>, vector<1x32x4xbf16>
    %10 = vector.shape_cast %9 : vector<1x32x4xbf16> to vector<32x4xbf16>
    %c0_12 = arith.constant 0 : index
    %c0_13 = arith.constant 0 : index
    %c0_14 = arith.constant 0 : index
    %11 = vector.load %arg9[%c0_12, %c0_13, %c0_14] : memref<1x32x4xbf16, #tpu.memory_space<vmem>>, vector<1x32x4xbf16>
    %12 = vector.shape_cast %11 : vector<1x32x4xbf16> to vector<32x4xbf16>
    %c0_15 = arith.constant 0 : index
    %c0_16 = arith.constant 0 : index
    %c0_17 = arith.constant 0 : index
    %13 = vector.load %arg11[%c0_15, %c0_16, %c0_17] : memref<1x4x32xbf16, #tpu.memory_space<vmem>>, vector<1x4x32xbf16>
    %14 = vector.shape_cast %13 : vector<1x4x32xbf16> to vector<4x32xbf16>
    %cst = arith.constant dense<0.000000e+00> : vector<8x4xf32>
    %15 = tpu.matmul %4, %8, %cst {dimension_numbers = #tpu.dot_dimension_numbers<[1], [0], [0], [1], [0, 0, 1, 1], [], []>} : vector<8x32xbf16>, vector<32x4xbf16>, vector<8x4xf32> -> vector<8x4xf32>
    %c0_18 = arith.constant 0 : index
    %c0_19 = arith.constant 0 : index
    %c0_20 = arith.constant 0 : index
    %16 = vector.load %arg6[%c0_18, %c0_19, %c0_20] : memref<1x1x4xf32, #tpu.memory_space<vmem>>, vector<1x1x4xf32>
    %17 = vector.shape_cast %16 : vector<1x1x4xf32> to vector<1x4xf32>
    %18 = vector.broadcast %17 : vector<1x4xf32> to vector<8x4xf32>
    %19 = arith.addf %15, %18 : vector<8x4xf32>
    %cst_21 = arith.constant dense<0.000000e+00> : vector<8x4xf32>
    %20 = tpu.matmul %6, %10, %cst_21 {dimension_numbers = #tpu.dot_dimension_numbers<[1], [0], [0], [1], [0, 0, 1, 1], [], []>} : vector<8x32xbf16>, vector<32x4xbf16>, vector<8x4xf32> -> vector<8x4xf32>
    %c0_22 = arith.constant 0 : index
    %c0_23 = arith.constant 0 : index
    %c0_24 = arith.constant 0 : index
    %21 = vector.load %arg8[%c0_22, %c0_23, %c0_24] : memref<1x1x4xf32, #tpu.memory_space<vmem>>, vector<1x1x4xf32>
    %22 = vector.shape_cast %21 : vector<1x1x4xf32> to vector<1x4xf32>
    %23 = vector.broadcast %22 : vector<1x4xf32> to vector<8x4xf32>
    %24 = arith.addf %20, %23 : vector<8x4xf32>
    %cst_25 = arith.constant dense<0.000000e+00> : vector<8x4xf32>
    %25 = tpu.matmul %6, %12, %cst_25 {dimension_numbers = #tpu.dot_dimension_numbers<[1], [0], [0], [1], [0, 0, 1, 1], [], []>} : vector<8x32xbf16>, vector<32x4xbf16>, vector<8x4xf32> -> vector<8x4xf32>
    %c0_26 = arith.constant 0 : index
    %c0_27 = arith.constant 0 : index
    %c0_28 = arith.constant 0 : index
    %26 = vector.load %arg10[%c0_26, %c0_27, %c0_28] : memref<1x1x4xf32, #tpu.memory_space<vmem>>, vector<1x1x4xf32>
    %27 = vector.shape_cast %26 : vector<1x1x4xf32> to vector<1x4xf32>
    %28 = vector.broadcast %27 : vector<1x4xf32> to vector<8x4xf32>
    %29 = arith.addf %25, %28 : vector<8x4xf32>
    %cst_29 = arith.constant 5.000000e-01 : f32
    %30 = vector.broadcast %cst_29 : f32 to vector<8x4xf32>
    %31 = arith.mulf %19, %30 : vector<8x4xf32>
    %32 = arith.truncf %31 : vector<8x4xf32> to vector<8x4xbf16>
    %33 = arith.truncf %24 : vector<8x4xf32> to vector<8x4xbf16>
    %cst_30 = arith.constant dense<0.000000e+00> : vector<8x8xf32>
    %34 = tpu.matmul %32, %33, %cst_30 {dimension_numbers = #tpu.dot_dimension_numbers<[1], [1], [0], [0], [0, 0, 1, 0], [], []>} : vector<8x4xbf16>, vector<8x4xbf16>, vector<8x8xf32> -> vector<8x8xf32>
    %cst_31 = arith.constant dense<0xFF800000> : vector<8xf32>
    %35 = vector.multi_reduction <maximumf>, %34, %cst_31 [1] : vector<8x8xf32> to vector<8xf32>
    %36 = vector.shape_cast %35 : vector<8xf32> to vector<8x1xf32>
    %37 = vector.broadcast %36 : vector<8x1xf32> to vector<8x8xf32>
    %38 = arith.subf %34, %37 : vector<8x8xf32>
    %39 = math.exp %38 : vector<8x8xf32>
    %cst_32 = arith.constant dense<0.000000e+00> : vector<8xf32>
    %40 = vector.multi_reduction <add>, %39, %cst_32 [1] : vector<8x8xf32> to vector<8xf32>
    %41 = vector.shape_cast %40 : vector<8xf32> to vector<8x1xf32>
    %42 = tpu.reciprocal %41 {approx = true} : vector<8x1xf32> -> vector<8x1xf32>
    %43 = vector.broadcast %42 : vector<8x1xf32> to vector<8x8xf32>
    %44 = arith.mulf %39, %43 : vector<8x8xf32>
    %45 = arith.truncf %44 : vector<8x8xf32> to vector<8x8xbf16>
    %46 = arith.truncf %29 : vector<8x4xf32> to vector<8x4xbf16>
    %cst_33 = arith.constant dense<0.000000e+00> : vector<8x4xf32>
    %47 = tpu.matmul %45, %46, %cst_33 {dimension_numbers = #tpu.dot_dimension_numbers<[1], [0], [0], [1], [0, 0, 1, 1], [], []>} : vector<8x8xbf16>, vector<8x4xbf16>, vector<8x4xf32> -> vector<8x4xf32>
    %c0_34 = arith.constant 0 : index
    %c0_35 = arith.constant 0 : index
    %48 = vector.load %arg16[%c0_34, %c0_35] : memref<8x32xf32, #tpu.memory_space<vmem>>, vector<8x32xf32>
    %49 = arith.truncf %47 : vector<8x4xf32> to vector<8x4xbf16>
    %cst_36 = arith.constant dense<0.000000e+00> : vector<8x32xf32>
    %50 = tpu.matmul %49, %14, %cst_36 {dimension_numbers = #tpu.dot_dimension_numbers<[1], [0], [0], [1], [0, 0, 1, 1], [], []>} : vector<8x4xbf16>, vector<4x32xbf16>, vector<8x32xf32> -> vector<8x32xf32>
    %51 = arith.addf %48, %50 : vector<8x32xf32>
    %c0_37 = arith.constant 0 : index
    %c0_38 = arith.constant 0 : index
    %52 = vector.load %arg16[%c0_37, %c0_38] : memref<8x32xf32, #tpu.memory_space<vmem>>, vector<8x32xf32>
    tpu.vector_store %arg16[%c0_37, %c0_38], %51 {strides = array<i32>} : memref<8x32xf32, #tpu.memory_space<vmem>>, vector<8x32xf32>,
    %c7_i32 = arith.constant 7 : i32
    %53 = arith.cmpi eq, %arg2, %c7_i32 : i32
    %54 = arith.extui %53 : i1 to i32
    %c0_i32_39 = arith.constant 0 : i32
    %55 = arith.cmpi ne, %54, %c0_i32_39 : i32
    scf.if %55 {
      %56 = arith.extf %4 : vector<8x32xbf16> to vector<8x32xf32>
      %c0_40 = arith.constant 0 : index
      %c0_41 = arith.constant 0 : index
      %57 = vector.load %arg16[%c0_40, %c0_41] : memref<8x32xf32, #tpu.memory_space<vmem>>, vector<8x32xf32>
      %58 = arith.addf %56, %57 : vector<8x32xf32>
      %c0_42 = arith.constant 0 : index
      %c0_43 = arith.constant 0 : index
      %59 = vector.load %arg12[%c0_42, %c0_43] : memref<1x32xf32, #tpu.memory_space<vmem>>, vector<1x32xf32>
      %60 = vector.broadcast %59 : vector<1x32xf32> to vector<8x32xf32>
      %61 = arith.addf %58, %60 : vector<8x32xf32>
      %c0_44 = arith.constant 0 : index
      %c0_45 = arith.constant 0 : index
      %62 = vector.load %arg13[%c0_44, %c0_45] : memref<1x32xf32, #tpu.memory_space<vmem>>, vector<1x32xf32>
      %c0_46 = arith.constant 0 : index
      %c0_47 = arith.constant 0 : index
      %63 = vector.load %arg14[%c0_46, %c0_47] : memref<1x32xf32, #tpu.memory_space<vmem>>, vector<1x32xf32>
      %cst_48 = arith.constant dense<0.000000e+00> : vector<8xf32>
      %64 = vector.multi_reduction <add>, %61, %cst_48 [1] : vector<8x32xf32> to vector<8xf32>
      %65 = vector.shape_cast %64 : vector<8xf32> to vector<8x1xf32>
      %cst_49 = arith.constant 3.200000e+01 : f32
      %66 = vector.broadcast %cst_49 : f32 to vector<8x1xf32>
      %67 = arith.divf %65, %66 : vector<8x1xf32>
      %68 = vector.broadcast %67 : vector<8x1xf32> to vector<8x32xf32>
      %69 = arith.subf %61, %68 : vector<8x32xf32>
      %70 = arith.mulf %69, %69 : vector<8x32xf32>
      %cst_50 = arith.constant dense<0.000000e+00> : vector<8xf32>
      %71 = vector.multi_reduction <add>, %70, %cst_50 [1] : vector<8x32xf32> to vector<8xf32>
      %72 = vector.shape_cast %71 : vector<8xf32> to vector<8x1xf32>
      %cst_51 = arith.constant 3.200000e+01 : f32
      %73 = vector.broadcast %cst_51 : f32 to vector<8x1xf32>
      %74 = arith.divf %72, %73 : vector<8x1xf32>
      %75 = vector.broadcast %67 : vector<8x1xf32> to vector<8x32xf32>
      %76 = arith.subf %61, %75 : vector<8x32xf32>
      %cst_52 = arith.constant 9.99999974E-6 : f32
      %77 = vector.broadcast %cst_52 : f32 to vector<8x1xf32>
      %78 = arith.addf %74, %77 : vector<8x1xf32>
      %79 = math.rsqrt %78 : vector<8x1xf32>
      %80 = vector.broadcast %79 : vector<8x1xf32> to vector<8x32xf32>
      %81 = arith.mulf %76, %80 : vector<8x32xf32>
      %82 = vector.broadcast %62 : vector<1x32xf32> to vector<8x32xf32>
      %83 = arith.mulf %81, %82 : vector<8x32xf32>
      %84 = vector.broadcast %63 : vector<1x32xf32> to vector<8x32xf32>
      %85 = arith.addf %83, %84 : vector<8x32xf32>
      %86 = arith.truncf %85 : vector<8x32xf32> to vector<8x32xbf16>
      %c0_53 = arith.constant 0 : index
      %c0_54 = arith.constant 0 : index
      %c0_55 = arith.constant 0 : index
      %87 = vector.load %arg15[%c0_53, %c0_54, %c0_55] : memref<1x8x32xbf16, #tpu.memory_space<vmem>>, vector<1x8x32xbf16>
      %88 = vector.shape_cast %87 : vector<1x8x32xbf16> to vector<8x32xbf16>
      %89 = vector.shape_cast %86 : vector<8x32xbf16> to vector<1x8x32xbf16>
      tpu.vector_store %arg15[%c0_53, %c0_54, %c0_55], %89 {strides = array<i32>} : memref<1x8x32xbf16, #tpu.memory_space<vmem>>, vector<1x8x32xbf16>,
    } else {
    }
    return
  }
  func.func @transform_0(%arg0: i32, %arg1: i32, %arg2: i32) -> (i32, i32, i32) {
    %c0_i32 = arith.constant 0 : i32
    %c0_i32_0 = arith.constant 0 : i32
    return %arg0, %arg1, %c0_i32 : i32, i32, i32
  }
  func.func @transform_1(%arg0: i32, %arg1: i32, %arg2: i32) -> (i32, i32, i32) {
    %c0_i32 = arith.constant 0 : i32
    %c0_i32_0 = arith.constant 0 : i32
    %c0_i32_1 = arith.constant 0 : i32
    return %arg0, %c0_i32, %c0_i32_0 : i32, i32, i32
  }
  func.func @transform_2(%arg0: i32, %arg1: i32, %arg2: i32) -> (i32, i32, i32) {
    %c0_i32 = arith.constant 0 : i32
    %c0_i32_0 = arith.constant 0 : i32
    %c0_i32_1 = arith.constant 0 : i32
    return %arg2, %c0_i32, %c0_i32_0 : i32, i32, i32
  }
  func.func @transform_3(%arg0: i32, %arg1: i32, %arg2: i32) -> (i32, i32, i32) {
    %c0_i32 = arith.constant 0 : i32
    %c0_i32_0 = arith.constant 0 : i32
    %c0_i32_1 = arith.constant 0 : i32
    return %arg2, %c0_i32, %c0_i32_0 : i32, i32, i32
  }
  func.func @transform_4(%arg0: i32, %arg1: i32, %arg2: i32) -> (i32, i32, i32) {
    %c0_i32 = arith.constant 0 : i32
    %c0_i32_0 = arith.constant 0 : i32
    %c0_i32_1 = arith.constant 0 : i32
    return %arg2, %c0_i32, %c0_i32_0 : i32, i32, i32
  }
  func.func @transform_5(%arg0: i32, %arg1: i32, %arg2: i32) -> (i32, i32, i32) {
    %c0_i32 = arith.constant 0 : i32
    %c0_i32_0 = arith.constant 0 : i32
    %c0_i32_1 = arith.constant 0 : i32
    return %arg2, %c0_i32, %c0_i32_0 : i32, i32, i32
  }
  func.func @transform_6(%arg0: i32, %arg1: i32, %arg2: i32) -> (i32, i32, i32) {
    %c0_i32 = arith.constant 0 : i32
    %c0_i32_0 = arith.constant 0 : i32
    %c0_i32_1 = arith.constant 0 : i32
    return %arg2, %c0_i32, %c0_i32_0 : i32, i32, i32
  }
  func.func @transform_7(%arg0: i32, %arg1: i32, %arg2: i32) -> (i32, i32, i32) {
    %c0_i32 = arith.constant 0 : i32
    %c0_i32_0 = arith.constant 0 : i32
    %c0_i32_1 = arith.constant 0 : i32
    return %arg2, %c0_i32, %c0_i32_0 : i32, i32, i32
  }
  func.func @transform_8(%arg0: i32, %arg1: i32, %arg2: i32) -> (i32, i32, i32) {
    %c0_i32 = arith.constant 0 : i32
    %c0_i32_0 = arith.constant 0 : i32
    %c0_i32_1 = arith.constant 0 : i32
    return %arg2, %c0_i32, %c0_i32_0 : i32, i32, i32
  }
  func.func @transform_9(%arg0: i32, %arg1: i32, %arg2: i32) -> (i32, i32) {
    %c0_i32 = arith.constant 0 : i32
    %c0_i32_0 = arith.constant 0 : i32
    %c0_i32_1 = arith.constant 0 : i32
    return %c0_i32, %c0_i32_0 : i32, i32
  }
  func.func @transform_10(%arg0: i32, %arg1: i32, %arg2: i32) -> (i32, i32) {
    %c0_i32 = arith.constant 0 : i32
    %c0_i32_0 = arith.constant 0 : i32
    %c0_i32_1 = arith.constant 0 : i32
    return %c0_i32, %c0_i32_0 : i32, i32
  }
  func.func @transform_11(%arg0: i32, %arg1: i32, %arg2: i32) -> (i32, i32) {
    %c0_i32 = arith.constant 0 : i32
    %c0_i32_0 = arith.constant 0 : i32
    %c0_i32_1 = arith.constant 0 : i32
    return %c0_i32, %c0_i32_0 : i32, i32
  }
  func.func @transform_12(%arg0: i32, %arg1: i32, %arg2: i32) -> (i32, i32, i32) {
    %c0_i32 = arith.constant 0 : i32
    %c0_i32_0 = arith.constant 0 : i32
    return %arg0, %arg1, %c0_i32 : i32, i32, i32
  }
}

module attributes {stable_mosaic.version = 11 : i64} {
  func.func @ffn_block_kernel(%arg0: i32, %arg1: memref<16x32xbf16, #tpu.memory_space<vmem>>, %arg2: memref<32x128xbf16, #tpu.memory_space<vmem>>, %arg3: memref<1x128xf32, #tpu.memory_space<vmem>>, %arg4: memref<128x32xbf16, #tpu.memory_space<vmem>>, %arg5: memref<1x32xf32, #tpu.memory_space<vmem>>, %arg6: memref<1x32xf32, #tpu.memory_space<vmem>>, %arg7: memref<1x32xf32, #tpu.memory_space<vmem>>, %arg8: memref<16x32xbf16, #tpu.memory_space<vmem>>) attributes {dimension_semantics = [#tpu.dimension_semantics<parallel>], iteration_bounds = array<i64: 1>, scalar_prefetch = 0 : i64, scratch_operands = 0 : i64, tpu.core_type = #tpu.core_type<tc>, window_params = [{transform_indices = @transform_0, window_bounds = array<i64: 16, 32>}, {pipeline_mode = #tpu.pipeline_mode<synchronous>, transform_indices = @transform_1, window_bounds = array<i64: 32, 128>}, {pipeline_mode = #tpu.pipeline_mode<synchronous>, transform_indices = @transform_2, window_bounds = array<i64: 1, 128>}, {pipeline_mode = #tpu.pipeline_mode<synchronous>, transform_indices = @transform_3, window_bounds = array<i64: 128, 32>}, {pipeline_mode = #tpu.pipeline_mode<synchronous>, transform_indices = @transform_4, window_bounds = array<i64: 1, 32>}, {pipeline_mode = #tpu.pipeline_mode<synchronous>, transform_indices = @transform_5, window_bounds = array<i64: 1, 32>}, {pipeline_mode = #tpu.pipeline_mode<synchronous>, transform_indices = @transform_6, window_bounds = array<i64: 1, 32>}, {transform_indices = @transform_7, window_bounds = array<i64: 16, 32>}]} {
    %c0 = arith.constant 0 : index
    %c0_0 = arith.constant 0 : index
    %0 = vector.load %arg1[%c0, %c0_0] : memref<16x32xbf16, #tpu.memory_space<vmem>>, vector<16x32xbf16>
    %c0_1 = arith.constant 0 : index
    %c0_2 = arith.constant 0 : index
    %1 = vector.load %arg2[%c0_1, %c0_2] : memref<32x128xbf16, #tpu.memory_space<vmem>>, vector<32x128xbf16>
    %c0_3 = arith.constant 0 : index
    %c0_4 = arith.constant 0 : index
    %2 = vector.load %arg4[%c0_3, %c0_4] : memref<128x32xbf16, #tpu.memory_space<vmem>>, vector<128x32xbf16>
    %cst = arith.constant dense<0.000000e+00> : vector<16x128xf32>
    %3 = tpu.matmul %0, %1, %cst {dimension_numbers = #tpu.dot_dimension_numbers<[1], [0], [0], [1], [0, 0, 1, 1], [], []>} : vector<16x32xbf16>, vector<32x128xbf16>, vector<16x128xf32> -> vector<16x128xf32>
    %c0_5 = arith.constant 0 : index
    %c0_6 = arith.constant 0 : index
    %4 = vector.load %arg3[%c0_5, %c0_6] : memref<1x128xf32, #tpu.memory_space<vmem>>, vector<1x128xf32>
    %5 = vector.broadcast %4 : vector<1x128xf32> to vector<16x128xf32>
    %6 = arith.addf %3, %5 : vector<16x128xf32>
    %cst_7 = arith.constant 0.000000e+00 : f32
    %7 = vector.broadcast %cst_7 : f32 to vector<16x128xf32>
    %8 = arith.maximumf %6, %7 : vector<16x128xf32>
    %9 = arith.truncf %8 : vector<16x128xf32> to vector<16x128xbf16>
    %cst_8 = arith.constant dense<0.000000e+00> : vector<16x32xf32>
    %10 = tpu.matmul %9, %2, %cst_8 {dimension_numbers = #tpu.dot_dimension_numbers<[1], [0], [0], [1], [0, 0, 1, 1], [], []>} : vector<16x128xbf16>, vector<128x32xbf16>, vector<16x32xf32> -> vector<16x32xf32>
    %c0_9 = arith.constant 0 : index
    %c0_10 = arith.constant 0 : index
    %11 = vector.load %arg5[%c0_9, %c0_10] : memref<1x32xf32, #tpu.memory_space<vmem>>, vector<1x32xf32>
    %12 = vector.broadcast %11 : vector<1x32xf32> to vector<16x32xf32>
    %13 = arith.addf %10, %12 : vector<16x32xf32>
    %14 = arith.extf %0 : vector<16x32xbf16> to vector<16x32xf32>
    %15 = arith.addf %14, %13 : vector<16x32xf32>
    %c0_11 = arith.constant 0 : index
    %c0_12 = arith.constant 0 : index
    %16 = vector.load %arg6[%c0_11, %c0_12] : memref<1x32xf32, #tpu.memory_space<vmem>>, vector<1x32xf32>
    %c0_13 = arith.constant 0 : index
    %c0_14 = arith.constant 0 : index
    %17 = vector.load %arg7[%c0_13, %c0_14] : memref<1x32xf32, #tpu.memory_space<vmem>>, vector<1x32xf32>
    %cst_15 = arith.constant dense<0.000000e+00> : vector<16xf32>
    %18 = vector.multi_reduction <add>, %15, %cst_15 [1] : vector<16x32xf32> to vector<16xf32>
    %19 = vector.shape_cast %18 : vector<16xf32> to vector<16x1xf32>
    %cst_16 = arith.constant 3.200000e+01 : f32
    %20 = vector.broadcast %cst_16 : f32 to vector<16x1xf32>
    %21 = arith.divf %19, %20 : vector<16x1xf32>
    %22 = vector.broadcast %21 : vector<16x1xf32> to vector<16x32xf32>
    %23 = arith.subf %15, %22 : vector<16x32xf32>
    %24 = arith.mulf %23, %23 : vector<16x32xf32>
    %cst_17 = arith.constant dense<0.000000e+00> : vector<16xf32>
    %25 = vector.multi_reduction <add>, %24, %cst_17 [1] : vector<16x32xf32> to vector<16xf32>
    %26 = vector.shape_cast %25 : vector<16xf32> to vector<16x1xf32>
    %cst_18 = arith.constant 3.200000e+01 : f32
    %27 = vector.broadcast %cst_18 : f32 to vector<16x1xf32>
    %28 = arith.divf %26, %27 : vector<16x1xf32>
    %29 = vector.broadcast %21 : vector<16x1xf32> to vector<16x32xf32>
    %30 = arith.subf %15, %29 : vector<16x32xf32>
    %cst_19 = arith.constant 9.99999974E-6 : f32
    %31 = vector.broadcast %cst_19 : f32 to vector<16x1xf32>
    %32 = arith.addf %28, %31 : vector<16x1xf32>
    %33 = math.rsqrt %32 : vector<16x1xf32>
    %34 = vector.broadcast %33 : vector<16x1xf32> to vector<16x32xf32>
    %35 = arith.mulf %30, %34 : vector<16x32xf32>
    %36 = vector.broadcast %16 : vector<1x32xf32> to vector<16x32xf32>
    %37 = arith.mulf %35, %36 : vector<16x32xf32>
    %38 = vector.broadcast %17 : vector<1x32xf32> to vector<16x32xf32>
    %39 = arith.addf %37, %38 : vector<16x32xf32>
    %40 = arith.truncf %39 : vector<16x32xf32> to vector<16x32xbf16>
    %c0_20 = arith.constant 0 : index
    %c0_21 = arith.constant 0 : index
    %41 = vector.load %arg8[%c0_20, %c0_21] : memref<16x32xbf16, #tpu.memory_space<vmem>>, vector<16x32xbf16>
    tpu.vector_store %arg8[%c0_20, %c0_21], %40 {strides = array<i32>} : memref<16x32xbf16, #tpu.memory_space<vmem>>, vector<16x32xbf16>,
    return
  }
  func.func @transform_0(%arg0: i32) -> (i32, i32) {
    %c0_i32 = arith.constant 0 : i32
    %c0_i32_0 = arith.constant 0 : i32
    return %arg0, %c0_i32 : i32, i32
  }
  func.func @transform_1(%arg0: i32) -> (i32, i32) {
    %c0_i32 = arith.constant 0 : i32
    %c0_i32_0 = arith.constant 0 : i32
    %c0_i32_1 = arith.constant 0 : i32
    return %c0_i32, %c0_i32_0 : i32, i32
  }
  func.func @transform_2(%arg0: i32) -> (i32, i32) {
    %c0_i32 = arith.constant 0 : i32
    %c0_i32_0 = arith.constant 0 : i32
    %c0_i32_1 = arith.constant 0 : i32
    return %c0_i32, %c0_i32_0 : i32, i32
  }
  func.func @transform_3(%arg0: i32) -> (i32, i32) {
    %c0_i32 = arith.constant 0 : i32
    %c0_i32_0 = arith.constant 0 : i32
    %c0_i32_1 = arith.constant 0 : i32
    return %c0_i32, %c0_i32_0 : i32, i32
  }
  func.func @transform_4(%arg0: i32) -> (i32, i32) {
    %c0_i32 = arith.constant 0 : i32
    %c0_i32_0 = arith.constant 0 : i32
    %c0_i32_1 = arith.constant 0 : i32
    return %c0_i32, %c0_i32_0 : i32, i32
  }
  func.func @transform_5(%arg0: i32) -> (i32, i32) {
    %c0_i32 = arith.constant 0 : i32
    %c0_i32_0 = arith.constant 0 : i32
    %c0_i32_1 = arith.constant 0 : i32
    return %c0_i32, %c0_i32_0 : i32, i32
  }
  func.func @transform_6(%arg0: i32) -> (i32, i32) {
    %c0_i32 = arith.constant 0 : i32
    %c0_i32_0 = arith.constant 0 : i32
    %c0_i32_1 = arith.constant 0 : i32
    return %c0_i32, %c0_i32_0 : i32, i32
  }
  func.func @transform_7(%arg0: i32) -> (i32, i32) {
    %c0_i32 = arith.constant 0 : i32
    %c0_i32_0 = arith.constant 0 : i32
    return %arg0, %c0_i32 : i32, i32
  }
}

module attributes {stable_mosaic.version = 11 : i64} {
  func.func @pool_classifier_kernel(%arg0: i32, %arg1: i32, %arg2: memref<2x8x32xbf16, #tpu.memory_space<vmem>>, %arg3: memref<32x16xf32, #tpu.memory_space<vmem>>, %arg4: memref<1x16xf32, #tpu.memory_space<vmem>>, %arg5: memref<16x8xf32, #tpu.memory_space<vmem>>, %arg6: memref<1x8xf32, #tpu.memory_space<vmem>>, %arg7: memref<8x1xf32, #tpu.memory_space<vmem>>, %arg8: memref<1x1xf32, #tpu.memory_space<vmem>>, %arg9: memref<2x1xf32, #tpu.memory_space<vmem>>, %arg10: memref<2x32xf32, #tpu.memory_space<vmem>>) attributes {dimension_semantics = [#tpu.dimension_semantics<parallel>, #tpu.dimension_semantics<arbitrary>], iteration_bounds = array<i64: 1, 1>, scalar_prefetch = 0 : i64, scratch_operands = 1 : i64, tpu.core_type = #tpu.core_type<tc>, window_params = [{transform_indices = @transform_0, window_bounds = array<i64: 2, 8, 32>}, {pipeline_mode = #tpu.pipeline_mode<synchronous>, transform_indices = @transform_1, window_bounds = array<i64: 32, 16>}, {pipeline_mode = #tpu.pipeline_mode<synchronous>, transform_indices = @transform_2, window_bounds = array<i64: 1, 16>}, {pipeline_mode = #tpu.pipeline_mode<synchronous>, transform_indices = @transform_3, window_bounds = array<i64: 16, 8>}, {pipeline_mode = #tpu.pipeline_mode<synchronous>, transform_indices = @transform_4, window_bounds = array<i64: 1, 8>}, {pipeline_mode = #tpu.pipeline_mode<synchronous>, transform_indices = @transform_5, window_bounds = array<i64: 8, 1>}, {pipeline_mode = #tpu.pipeline_mode<synchronous>, transform_indices = @transform_6, window_bounds = array<i64: 1, 1>}, {transform_indices = @transform_7, window_bounds = array<i64: 2, 1>}]} {
    %c0_i32 = arith.constant 0 : i32
    %0 = arith.cmpi eq, %arg1, %c0_i32 : i32
    %1 = arith.extui %0 : i1 to i32
    %c0_i32_0 = arith.constant 0 : i32
    %2 = arith.cmpi ne, %1, %c0_i32_0 : i32
    scf.if %2 {
      %cst_11 = arith.constant 0.000000e+00 : f32
      %22 = vector.broadcast %cst_11 : f32 to vector<2x32xf32>
      %c0_12 = arith.constant 0 : index
      %c0_13 = arith.constant 0 : index
      %23 = vector.load %arg10[%c0_12, %c0_13] : memref<2x32xf32, #tpu.memory_space<vmem>>, vector<2x32xf32>
      tpu.vector_store %arg10[%c0_12, %c0_13], %22 {strides = array<i32>} : memref<2x32xf32, #tpu.memory_space<vmem>>, vector<2x32xf32>,
    } else {
    }
    %c0 = arith.constant 0 : index
    %c0_1 = arith.constant 0 : index
    %c0_2 = arith.constant 0 : index
    %3 = vector.load %arg2[%c0, %c0_1, %c0_2] : memref<2x8x32xbf16, #tpu.memory_space<vmem>>, vector<2x8x32xbf16>
    %4 = arith.extf %3 : vector<2x8x32xbf16> to vector<2x8x32xf32>
    %c8_i32 = arith.constant 8 : i32
    %5 = arith.muli %arg1, %c8_i32 : i32
    %6 = tpu.iota {dimensions = array<i32: 1>} : vector<1x8x1xi32>
    %7 = vector.broadcast %5 : i32 to vector<1x8x1xi32>
    %8 = arith.addi %7, %6 : vector<1x8x1xi32>
    %c8_i32_3 = arith.constant 8 : i32
    %9 = vector.broadcast %c8_i32_3 : i32 to vector<1x8x1xi32>
    %10 = arith.cmpi slt, %8, %9 : vector<1x8x1xi32>
    %cst = arith.constant 0.000000e+00 : f32
    %11 = vector.shape_cast %10 : vector<1x8x1xi1> to vector<1x8x1xi1>
    %12 = vector.broadcast %11 : vector<1x8x1xi1> to vector<2x8x32xi1>
    %13 = vector.broadcast %cst : f32 to vector<2x8x32xf32>
    %14 = arith.select %12, %4, %13 : vector<2x8x32xi1>, vector<2x8x32xf32>
    %c0_4 = arith.constant 0 : index
    %c0_5 = arith.constant 0 : index
    %15 = vector.load %arg10[%c0_4, %c0_5] : memref<2x32xf32, #tpu.memory_space<vmem>>, vector<2x32xf32>
    %cst_6 = arith.constant dense<0.000000e+00> : vector<2x32xf32>
    %16 = vector.multi_reduction <add>, %14, %cst_6 [1] : vector<2x8x32xf32> to vector<2x32xf32>
    %17 = arith.addf %15, %16 : vector<2x32xf32>
    %c0_7 = arith.constant 0 : index
    %c0_8 = arith.constant 0 : index
    %18 = vector.load %arg10[%c0_7, %c0_8] : memref<2x32xf32, #tpu.memory_space<vmem>>, vector<2x32xf32>
    tpu.vector_store %arg10[%c0_7, %c0_8], %17 {strides = array<i32>} : memref<2x32xf32, #tpu.memory_space<vmem>>, vector<2x32xf32>,
    %c0_i32_9 = arith.constant 0 : i32
    %19 = arith.cmpi eq, %arg1, %c0_i32_9 : i32
    %20 = arith.extui %19 : i1 to i32
    %c0_i32_10 = arith.constant 0 : i32
    %21 = arith.cmpi ne, %20, %c0_i32_10 : i32
    scf.if %21 {
      %c0_11 = arith.constant 0 : index
      %c0_12 = arith.constant 0 : index
      %22 = vector.load %arg10[%c0_11, %c0_12] : memref<2x32xf32, #tpu.memory_space<vmem>>, vector<2x32xf32>
      %cst_13 = arith.constant 1.250000e-01 : f32
      %23 = vector.broadcast %cst_13 : f32 to vector<2x32xf32>
      %24 = arith.mulf %22, %23 : vector<2x32xf32>
      %c0_14 = arith.constant 0 : index
      %c0_15 = arith.constant 0 : index
      %25 = vector.load %arg3[%c0_14, %c0_15] : memref<32x16xf32, #tpu.memory_space<vmem>>, vector<32x16xf32>
      %cst_16 = arith.constant dense<0.000000e+00> : vector<2x16xf32>
      %26 = tpu.matmul %24, %25, %cst_16 {dimension_numbers = #tpu.dot_dimension_numbers<[1], [0], [0], [1], [0, 0, 1, 1], [], []>} : vector<2x32xf32>, vector<32x16xf32>, vector<2x16xf32> -> vector<2x16xf32>
      %c0_17 = arith.constant 0 : index
      %c0_18 = arith.constant 0 : index
      %27 = vector.load %arg4[%c0_17, %c0_18] : memref<1x16xf32, #tpu.memory_space<vmem>>, vector<1x16xf32>
      %28 = vector.broadcast %27 : vector<1x16xf32> to vector<2x16xf32>
      %29 = arith.addf %26, %28 : vector<2x16xf32>
      %cst_19 = arith.constant 0.000000e+00 : f32
      %30 = vector.broadcast %cst_19 : f32 to vector<2x16xf32>
      %31 = arith.maximumf %29, %30 : vector<2x16xf32>
      %c0_20 = arith.constant 0 : index
      %c0_21 = arith.constant 0 : index
      %32 = vector.load %arg5[%c0_20, %c0_21] : memref<16x8xf32, #tpu.memory_space<vmem>>, vector<16x8xf32>
      %cst_22 = arith.constant dense<0.000000e+00> : vector<2x8xf32>
      %33 = tpu.matmul %31, %32, %cst_22 {dimension_numbers = #tpu.dot_dimension_numbers<[1], [0], [0], [1], [0, 0, 1, 1], [], []>} : vector<2x16xf32>, vector<16x8xf32>, vector<2x8xf32> -> vector<2x8xf32>
      %c0_23 = arith.constant 0 : index
      %c0_24 = arith.constant 0 : index
      %34 = vector.load %arg6[%c0_23, %c0_24] : memref<1x8xf32, #tpu.memory_space<vmem>>, vector<1x8xf32>
      %35 = vector.broadcast %34 : vector<1x8xf32> to vector<2x8xf32>
      %36 = arith.addf %33, %35 : vector<2x8xf32>
      %cst_25 = arith.constant 0.000000e+00 : f32
      %37 = vector.broadcast %cst_25 : f32 to vector<2x8xf32>
      %38 = arith.maximumf %36, %37 : vector<2x8xf32>
      %c0_26 = arith.constant 0 : index
      %c0_27 = arith.constant 0 : index
      %39 = vector.load %arg7[%c0_26, %c0_27] : memref<8x1xf32, #tpu.memory_space<vmem>>, vector<8x1xf32>
      %cst_28 = arith.constant dense<0.000000e+00> : vector<2x1xf32>
      %40 = tpu.matmul %38, %39, %cst_28 {dimension_numbers = #tpu.dot_dimension_numbers<[1], [0], [0], [1], [0, 0, 1, 1], [], []>} : vector<2x8xf32>, vector<8x1xf32>, vector<2x1xf32> -> vector<2x1xf32>
      %c0_29 = arith.constant 0 : index
      %c0_30 = arith.constant 0 : index
      %41 = vector.load %arg8[%c0_29, %c0_30] : memref<1x1xf32, #tpu.memory_space<vmem>>, vector<1x1xf32>
      %42 = vector.broadcast %41 : vector<1x1xf32> to vector<2x1xf32>
      %43 = arith.addf %40, %42 : vector<2x1xf32>
      %44 = arith.negf %43 : vector<2x1xf32>
      %45 = math.exp %44 : vector<2x1xf32>
      %cst_31 = arith.constant 1.000000e+00 : f32
      %46 = vector.broadcast %cst_31 : f32 to vector<2x1xf32>
      %47 = arith.addf %46, %45 : vector<2x1xf32>
      %48 = arith.divf %46, %47 : vector<2x1xf32>
      %c0_32 = arith.constant 0 : index
      %c0_33 = arith.constant 0 : index
      %49 = vector.load %arg9[%c0_32, %c0_33] : memref<2x1xf32, #tpu.memory_space<vmem>>, vector<2x1xf32>
      tpu.vector_store %arg9[%c0_32, %c0_33], %48 {strides = array<i32>} : memref<2x1xf32, #tpu.memory_space<vmem>>, vector<2x1xf32>,
    } else {
    }
    return
  }
  func.func @transform_0(%arg0: i32, %arg1: i32) -> (i32, i32, i32) {
    %c0_i32 = arith.constant 0 : i32
    %c0_i32_0 = arith.constant 0 : i32
    return %arg0, %arg1, %c0_i32 : i32, i32, i32
  }
  func.func @transform_1(%arg0: i32, %arg1: i32) -> (i32, i32) {
    %c0_i32 = arith.constant 0 : i32
    %c0_i32_0 = arith.constant 0 : i32
    %c0_i32_1 = arith.constant 0 : i32
    return %c0_i32, %c0_i32_0 : i32, i32
  }
  func.func @transform_2(%arg0: i32, %arg1: i32) -> (i32, i32) {
    %c0_i32 = arith.constant 0 : i32
    %c0_i32_0 = arith.constant 0 : i32
    %c0_i32_1 = arith.constant 0 : i32
    return %c0_i32, %c0_i32_0 : i32, i32
  }
  func.func @transform_3(%arg0: i32, %arg1: i32) -> (i32, i32) {
    %c0_i32 = arith.constant 0 : i32
    %c0_i32_0 = arith.constant 0 : i32
    %c0_i32_1 = arith.constant 0 : i32
    return %c0_i32, %c0_i32_0 : i32, i32
  }
  func.func @transform_4(%arg0: i32, %arg1: i32) -> (i32, i32) {
    %c0_i32 = arith.constant 0 : i32
    %c0_i32_0 = arith.constant 0 : i32
    %c0_i32_1 = arith.constant 0 : i32
    return %c0_i32, %c0_i32_0 : i32, i32
  }
  func.func @transform_5(%arg0: i32, %arg1: i32) -> (i32, i32) {
    %c0_i32 = arith.constant 0 : i32
    %c0_i32_0 = arith.constant 0 : i32
    %c0_i32_1 = arith.constant 0 : i32
    return %c0_i32, %c0_i32_0 : i32, i32
  }
  func.func @transform_6(%arg0: i32, %arg1: i32) -> (i32, i32) {
    %c0_i32 = arith.constant 0 : i32
    %c0_i32_0 = arith.constant 0 : i32
    %c0_i32_1 = arith.constant 0 : i32
    return %c0_i32, %c0_i32_0 : i32, i32
  }
  func.func @transform_7(%arg0: i32, %arg1: i32) -> (i32, i32) {
    %c0_i32 = arith.constant 0 : i32
    %c0_i32_0 = arith.constant 0 : i32
    return %arg0, %c0_i32 : i32, i32
  }
}

</mosaic_0001>

<llo_original>
// kernel: tpu_custom_call.1
$region0: #{tpu_custom_call.1}
  #allocation0 [shape = 'u32[]', space=smem, size = 0x4, offset = 0x4, fixed_abs, tag = 'smem constant byte address 0x4 - core index']
  #allocation1 [shape = 'u32[144,128]{1,0:T(1,128)}', space=vmem, size = 0x12000, scoped, tag = 'internal scratch']
  %s0 = inlined_call_operand.hbm [shape: f32[8,128], index: 0, kind: input, shape index: {}]
  %s1 = inlined_call_operand.hbm [shape: f32[16,128], index: 1, kind: input, shape index: {}]
  %s2 = inlined_call_operand.hbm [shape: f32[16,128], index: 2, kind: output, shape index: {}]
  %s3 = sld [smem:[#allocation0]]
  $region49: #{tpu_custom_call.1} parent=0
    _
  %s5 = ssub.s32 1, %s3
  %s6 = scalar_select 0, %s5, %s3
  $region1: #{tpu_custom_call.1} parent=0
    #allocation2 [shape = 'u8[4096]{0}', space=vmem, size = 0x1000, scoped, tag = 'input window, operand 0, single buffered']
    #allocation3 [shape = 's32[2]{0}', space=sflag, size = 0x8, scoped, tag = 'scoped memory for tpu_custom_call.1']
    #allocation4 [shape = 's32[2]{0}', space=sflag, size = 0x8, scoped, tag = 'scoped memory for tpu_custom_call.1']
    #allocation5 [shape = 'u8[8192]{0}', space=vmem, size = 0x2000, scoped, tag = 'input window, operand 1']
    #allocation6 [shape = 's32[2]{0}', space=sflag, size = 0x8, scoped, tag = 'scoped memory for tpu_custom_call.1']
    #allocation7 [shape = 'u8[8192]{0}', space=vmem, size = 0x2000, scoped, tag = 'output window, operand 0']
    %7 = vsyncpa [#allocation3], 0
    %8 = vsyncpa [#allocation6], 0
    %s9 = scalar_lea.sflag [#allocation6], 1
    %10 = vsyncpa %s9, 0
    %11 = vsyncpa [#allocation4], 0
    %s12 = scalar_lea.sflag [#allocation4], 1
    %13 = vsyncpa %s12, 0
    loop: start=0, step=1, limit=4
    $region2: #{tpu_custom_call.1} parent=1 // loop_pre_header
      _
    $region3: #{tpu_custom_call.1} parent=1 // loop_header
      %s15 = sphi 0, %s19
      %p16 = scmp.ge.s32.totalorder %s15, 4
      %s23 = sphi 0, %s23
      %s25 = sphi 0, %s23
      %s26 = sphi 0, %s25
      %s40 = sphi 0, %s26
      %s46 = sphi 0, %s48
      %s49 = sphi 0, %s46
      %s50 = sphi 0, %s49
      %s66 = sphi 0, %s50
      %s72 = sphi 0, %s74
      %s75 = sphi 0, %s72
      %s76 = sphi 0, %s75
      %s92 = sphi 0, %s76
    $region4: #{tpu_custom_call.1} parent=1 // loop_header_branch
      %18 = sbr.rel (%p16) target = $region8
    $region5: #{tpu_custom_call.1} parent=1 // loop_body
      %s20 = ssub.s32 %s15, 1
      %s21 = ssub.s32 %s15, 2
      %s22 = sadd.s32 %s15, 1
      %s24 = sadd.s32 %s23, 1
      %p27 = scmp.eq.s32.totalorder %s15, 1
      %p28 = scmp.ne.s32.totalorder %s23, %s25
      %p29 = scmp.eq.s32.totalorder %s15, 0
      %p30 = por %p28, %p29
      %p31 = scmp.ne.s32.totalorder %s23, %s25
      %p32 = scmp.eq.s32.totalorder %s20, 1
      %p33 = por %p31, %p32
      %p34 = scmp.ne.s32.totalorder %s25, %s26
      %p35 = scmp.eq.s32.totalorder %s20, 0
      %p36 = por %p34, %p35
      %p37 = scmp.ne.s32.totalorder %s25, %s26
      %p38 = scmp.eq.s32.totalorder %s21, 1
      %p39 = por %p37, %p38
      %p41 = scmp.ne.s32.totalorder %s26, %s40
      %p42 = scmp.eq.s32.totalorder %s21, 0
      %p43 = por %p41, %p42
      %s44 = ssub.s32 %s15, %s22
      %p45 = scmp.eq.s32.totalorder %s44, 0
      %s47 = sadd.s32 %s46, 1
      %s48 = scalar_select %p45, %s46, %s47
      %p51 = pneg %p45
      %p52 = scmp.eq.s32.totalorder %s15, 1
      %p53 = por %p51, %p52
      %p54 = scmp.ne.s32.totalorder %s46, %s49
      %p55 = scmp.eq.s32.totalorder %s15, 0
      %p56 = por %p54, %p55
      %p57 = scmp.ne.s32.totalorder %s46, %s49
      %p58 = scmp.eq.s32.totalorder %s20, 1
      %p59 = por %p57, %p58
      %p60 = scmp.ne.s32.totalorder %s49, %s50
      %p61 = scmp.eq.s32.totalorder %s20, 0
      %p62 = por %p60, %p61
      %p63 = scmp.ne.s32.totalorder %s49, %s50
      %p64 = scmp.eq.s32.totalorder %s21, 1
      %p65 = por %p63, %p64
      %p67 = scmp.ne.s32.totalorder %s50, %s66
      %p68 = scmp.eq.s32.totalorder %s21, 0
      %p69 = por %p67, %p68
      %s70 = ssub.s32 %s15, %s22
      %p71 = scmp.eq.s32.totalorder %s70, 0
      %s73 = sadd.s32 %s72, 1
      %s74 = scalar_select %p71, %s72, %s73
      %p77 = pneg %p71
      %p78 = scmp.eq.s32.totalorder %s15, 1
      %p79 = por %p77, %p78
      %p80 = scmp.ne.s32.totalorder %s72, %s75
      %p81 = scmp.eq.s32.totalorder %s15, 0
      %p82 = por %p80, %p81
      %p83 = scmp.ne.s32.totalorder %s72, %s75
      %p84 = scmp.eq.s32.totalorder %s20, 1
      %p85 = por %p83, %p84
      %p86 = scmp.ne.s32.totalorder %s75, %s76
      %p87 = scmp.eq.s32.totalorder %s20, 0
      %p88 = por %p86, %p87
      %p89 = scmp.ne.s32.totalorder %s75, %s76
      %p90 = scmp.eq.s32.totalorder %s21, 1
      %p91 = por %p89, %p90
      %p93 = scmp.ne.s32.totalorder %s76, %s92
      %p94 = scmp.eq.s32.totalorder %s21, 0
      %p95 = por %p93, %p94
      %p96 = scmp.le.s32.totalorder 1, %s15
      %p97 = scmp.lt.s32.totalorder %s15, 3
      %p98 = pnand %p96, %p97
      %p99 = pneg %p98
      // Predicated region
      $region9: #{tpu_custom_call.1} parent=5 // pred_check
        _
      $region10: #{tpu_custom_call.1} parent=5 // pred_check_branch
        %101 = sbr.rel (%p98) target = $region12
      $region11: #{tpu_custom_call.1} parent=5 // pred_region
        %s102 = ssub.s32 %s15, 1
        // Predicated region
        $region13: #{tpu_custom_call.1} parent=11 // pred_check
          %p103 = pneg %p36
        $region14: #{tpu_custom_call.1} parent=11 // pred_check_branch
          %105 = sbr.rel (%p103) target = $region16
        $region15: #{tpu_custom_call.1} parent=11 // pred_region
          %s107 = ssub.s32 128, 128
          %108 = vsyncadd [#allocation3], %s107
          %s110 = sshll.u32 [#allocation2], 4
          %s111 = int_to_ptr.vmem [resolvable:$true] %s110
          %113 = dma.hbm_to_vmem [thread:$0]  %s0, 128, %s111, [#allocation3]
        $region16: #{tpu_custom_call.1} parent=11 // pred_fallthru
          _
      $region12: #{tpu_custom_call.1} parent=5 // pred_fallthru
        _
      %p114 = scmp.lt.s32.totalorder %s15, 2
      // Predicated region
      $region17: #{tpu_custom_call.1} parent=5 // pred_check
        %p115 = pneg %p114
      $region18: #{tpu_custom_call.1} parent=5 // pred_check_branch
        %117 = sbr.rel (%p115) target = $region20
      $region19: #{tpu_custom_call.1} parent=5 // pred_region
        // Predicated region
        $region21: #{tpu_custom_call.1} parent=19 // pred_check
          %p118 = pneg %p56
        $region22: #{tpu_custom_call.1} parent=19 // pred_check_branch
          %120 = sbr.rel (%p118) target = $region24
        $region23: #{tpu_custom_call.1} parent=19 // pred_region
          %s121 = sand.u32 %s46, 1
          %s122 = scalar_lea.sflag [#allocation6], %s121
          %s123 = sand.u32 %s46, 1
          %s124 = smul.addr %s123, 8
          %s125 = scalar_lea.vmem [#allocation5], %s124
          %s127 = ssub.s32 128, 128
          %128 = vsyncadd %s122, %s127
          %s129 = smul.addr %s15, 128
          %s130 = scalar_lea.hbm %s1, %s129
          %s132 = sshll.u32 %s125, 4
          %s133 = int_to_ptr.vmem [resolvable:$true] %s132
          %135 = dma.hbm_to_vmem [thread:$0]  %s130, 128, %s133, %s122
        $region24: #{tpu_custom_call.1} parent=19 // pred_fallthru
          _
      $region20: #{tpu_custom_call.1} parent=5 // pred_fallthru
        _
      %p136 = scmp.le.s32.totalorder 1, %s15
      %p137 = scmp.lt.s32.totalorder %s15, 3
      %p138 = pnand %p136, %p137
      %p139 = pneg %p138
      // Predicated region
      $region25: #{tpu_custom_call.1} parent=5 // pred_check
        _
      $region26: #{tpu_custom_call.1} parent=5 // pred_check_branch
        %141 = sbr.rel (%p138) target = $region28
      $region27: #{tpu_custom_call.1} parent=5 // pred_region
        %s142 = ssub.s32 %s15, 1
        // Predicated region
        $region29: #{tpu_custom_call.1} parent=27 // pred_check
          %p143 = pneg %p36
        $region30: #{tpu_custom_call.1} parent=27 // pred_check_branch
          %145 = sbr.rel (%p143) target = $region32
        $region31: #{tpu_custom_call.1} parent=27 // pred_region
          %146 = dma.done [#allocation3], 128
        $region32: #{tpu_custom_call.1} parent=27 // pred_fallthru
          _
        %s147 = sand.u32 %s49, 1
        %s148 = scalar_lea.sflag [#allocation6], %s147
        %s149 = sand.u32 %s49, 1
        %s150 = smul.addr %s149, 8
        %s151 = scalar_lea.vmem [#allocation5], %s150
        // Predicated region
        $region33: #{tpu_custom_call.1} parent=27 // pred_check
          %p152 = pneg %p62
        $region34: #{tpu_custom_call.1} parent=27 // pred_check_branch
          %154 = sbr.rel (%p152) target = $region36
        $region35: #{tpu_custom_call.1} parent=27 // pred_region
          %155 = dma.done %s148, 128
        $region36: #{tpu_custom_call.1} parent=27 // pred_fallthru
          _
        %p156 = pneg %p36
        %p157 = pneg %p33
        %s158 = sand.u32 %s49, 1
        %s159 = scalar_lea.sflag [#allocation6], %s158
        %s160 = sand.u32 %s49, 1
        %s161 = smul.addr %s160, 8
        %s162 = scalar_lea.vmem [#allocation5], %s161
        %p163 = pneg %p62
        %p164 = pneg %p59
        %p165 = pneg %p88
        %p166 = pneg %p85
        %s167 = sand.u32 %s75, 1
        %s168 = scalar_lea.sflag [#allocation4], %s167
        %s169 = sand.u32 %s75, 1
        %s170 = smul.addr %s169, 8
        %s171 = scalar_lea.vmem [#allocation7], %s170
        %v172 = vld [vmem:[%s151] sm:$0xff]
        %v173 = vld [vmem:[#allocation2] sm:$0xff]
        %v174 = vadd.f32 %v172, %v173
        %175 = vst [vmem:[%s171] sm:$0xff] %v174
        %s176 = sand.u32 %s75, 1
        %s177 = scalar_lea.sflag [#allocation4], %s176
        %s178 = sand.u32 %s75, 1
        %s179 = smul.addr %s178, 8
        %s180 = scalar_lea.vmem [#allocation7], %s179
        // Predicated region
        $region37: #{tpu_custom_call.1} parent=27 // pred_check
          %p181 = pneg %p85
        $region38: #{tpu_custom_call.1} parent=27 // pred_check_branch
          %183 = sbr.rel (%p181) target = $region40
        $region39: #{tpu_custom_call.1} parent=27 // pred_region
          %s185 = ssub.s32 128, 128
          %186 = vsyncadd %s177, %s185
          %s187 = smul.addr %s20, 128
          %s188 = scalar_lea.hbm %s2, %s187
          %s190 = sshll.u32 %s180, 4
          %s191 = int_to_ptr.vmem [resolvable:$true] %s190
          %193 = dma.vmem_to_hbm [thread:$0]  %s191, 128, %s188, %s177
        $region40: #{tpu_custom_call.1} parent=27 // pred_fallthru
          _
      $region28: #{tpu_custom_call.1} parent=5 // pred_fallthru
        _
      %p194 = scmp.le.s32.totalorder 2, %s15
      // Predicated region
      $region41: #{tpu_custom_call.1} parent=5 // pred_check
        %p195 = pneg %p194
      $region42: #{tpu_custom_call.1} parent=5 // pred_check_branch
        %197 = sbr.rel (%p195) target = $region44
      $region43: #{tpu_custom_call.1} parent=5 // pred_region
        %s198 = ssub.s32 %s15, 2
        // Predicated region
        $region45: #{tpu_custom_call.1} parent=43 // pred_check
          %p199 = pneg %p91
        $region46: #{tpu_custom_call.1} parent=43 // pred_check_branch
          %201 = sbr.rel (%p199) target = $region48
        $region47: #{tpu_custom_call.1} parent=43 // pred_region
          %s202 = sand.u32 %s76, 1
          %s203 = scalar_lea.sflag [#allocation4], %s202
          %s204 = sand.u32 %s76, 1
          %s205 = smul.addr %s204, 8
          %s206 = scalar_lea.vmem [#allocation7], %s205
          %207 = dma.done %s203, 128
        $region48: #{tpu_custom_call.1} parent=43 // pred_fallthru
          _
      $region44: #{tpu_custom_call.1} parent=5 // pred_fallthru
        _
    $region6: #{tpu_custom_call.1} parent=1 // loop_footer
      %s19 = sadd.s32 1, %s15
    $region7: #{tpu_custom_call.1} parent=1 // loop_footer_branch
      %14 = sbr.rel target = $region3
    $region8: #{tpu_custom_call.1} parent=1 // loop_exit
      _
    %208 = vsyncpa [#allocation3], 1
    %s209 = scalar_lea.sflag [#allocation3], 1
    %210 = vsyncpa %s209, 1
    %211 = vsyncpa [#allocation6], 1
    %s212 = scalar_lea.sflag [#allocation6], 1
    %213 = vsyncpa %s212, 1
    %214 = vsyncpa [#allocation4], 1
    %s215 = scalar_lea.sflag [#allocation4], 1
    %216 = vsyncpa %s215, 1

// kernel: v2i_transformer_encoder.5
$region0: #{v2i_transformer_encoder.5}
  #allocation0 [shape = 'u32[]', space=smem, size = 0x4, offset = 0x4, fixed_abs, tag = 'smem constant byte address 0x4 - core index']
  #allocation1 [shape = 'u32[144,128]{1,0:T(1,128)}', space=vmem, size = 0x12000, scoped, tag = 'internal scratch']
  #allocation2 [shape = 'f32[8,32]{1,0:T(8,128)}', space=vmem, size = 0x1000, scoped, tag = 'scratch operand']
  %s0 = inlined_call_operand.vmem [shape: bf16[2,8,32], index: 0, kind: input, shape index: {}, may-alias: {0,1}]
  %s1 = inlined_call_operand.vmem [shape: bf16[2,8,32], index: 1, kind: input, shape index: {}, may-alias: {0,1}]
  %s2 = inlined_call_operand.vmem [shape: bf16[8,32,4], index: 2, kind: input, shape index: {}]
  %s3 = inlined_call_operand.vmem [shape: f32[8,1,4], index: 3, kind: input, shape index: {}]
  %s4 = inlined_call_operand.vmem [shape: bf16[8,32,4], index: 4, kind: input, shape index: {}]
  %s5 = inlined_call_operand.vmem [shape: f32[8,1,4], index: 5, kind: input, shape index: {}]
  %s6 = inlined_call_operand.vmem [shape: bf16[8,32,4], index: 6, kind: input, shape index: {}]
  %s7 = inlined_call_operand.vmem [shape: f32[8,1,4], index: 7, kind: input, shape index: {}]
  %s8 = inlined_call_operand.vmem [shape: bf16[8,4,32], index: 8, kind: input, shape index: {}]
  %s9 = inlined_call_operand.vmem [shape: f32[1,32], index: 9, kind: input, shape index: {}]
  %s10 = inlined_call_operand.vmem [shape: f32[1,32], index: 10, kind: input, shape index: {}]
  %s11 = inlined_call_operand.vmem [shape: f32[1,32], index: 11, kind: input, shape index: {}]
  %s12 = inlined_call_operand.vmem [shape: bf16[2,8,32], index: 12, kind: output, shape index: {}]
  %s13 = sld [smem:[#allocation0]]
  $region89: #{v2i_transformer_encoder.5} parent=0
    _
  %s15 = ssub.s32 1, %s13
  %s16 = scalar_select 0, %s15, %s13
  loop: start=0, step=1, limit=18
  $region2: #{v2i_transformer_encoder.5} parent=0 // loop_pre_header
    _
  $region3: #{v2i_transformer_encoder.5} parent=0 // loop_header
    %s18 = sphi 0, %s22
    %p19 = scmp.ge.s32.totalorder %s18, 18
    %s25 = sphi 0, %s44
    %s26 = sphi 0, %s40
    %s27 = sphi 0, %s36
    %s28 = sphi 0, %s25
    %s29 = sphi 0, %s26
    %s30 = sphi 0, %s27
    %s31 = sphi 0, %s28
    %s32 = sphi 0, %s29
    %s33 = sphi 0, %s30
    %s49 = sphi 0, %s51
    %s52 = sphi 0, %s49
    %s53 = sphi 0, %s52
    %s69 = sphi 0, %s53
    %s75 = sphi 0, %s77
    %s78 = sphi 0, %s75
    %s79 = sphi 0, %s78
    %s95 = sphi 0, %s79
    %s101 = sphi 0, %s103
    %s104 = sphi 0, %s101
    %s105 = sphi 0, %s104
    %s121 = sphi 0, %s105
    %s127 = sphi 0, %s129
    %s130 = sphi 0, %s127
    %s131 = sphi 0, %s130
    %s147 = sphi 0, %s131
    %s153 = sphi 0, %s155
    %s156 = sphi 0, %s153
    %s157 = sphi 0, %s156
    %s173 = sphi 0, %s157
    %s179 = sphi 0, %s181
    %s182 = sphi 0, %s179
    %s183 = sphi 0, %s182
    %s199 = sphi 0, %s183
    %s205 = sphi 0, %s207
    %s208 = sphi 0, %s205
    %s209 = sphi 0, %s208
    %s225 = sphi 0, %s209
    %s231 = sphi 0, %s233
    %s234 = sphi 0, %s231
    %s235 = sphi 0, %s234
    %s251 = sphi 0, %s235
    %s257 = sphi 0, %s259
    %s260 = sphi 0, %s257
    %s261 = sphi 0, %s260
    %s277 = sphi 0, %s261
    %s281 = sphi 0, %s281
    %s283 = sphi 0, %s281
    %s284 = sphi 0, %s283
    %s298 = sphi 0, %s284
    %s302 = sphi 0, %s302
    %s304 = sphi 0, %s302
    %s305 = sphi 0, %s304
    %s319 = sphi 0, %s305
    %s323 = sphi 0, %s323
    %s325 = sphi 0, %s323
    %s326 = sphi 0, %s325
    %s340 = sphi 0, %s326
    %s348 = sphi 0, %s350
    %s351 = sphi 0, %s348
    %s352 = sphi 0, %s351
    %s368 = sphi 0, %s352
  $region4: #{v2i_transformer_encoder.5} parent=0 // loop_header_branch
    %21 = sbr.rel (%p19) target = $region8
  $region5: #{v2i_transformer_encoder.5} parent=0 // loop_body
    %s23 = ssub.s32 %s18, 1
    %s24 = ssub.s32 %s18, 2
    %s34 = sadd.s32 1, %s27
    %p35 = scmp.ge.s32.totalorder %s34, 8
    %s36 = scalar_select %p35, 0, %s34
    %s37 = sadd.s32 1, %s26
    %s38 = scalar_select %p35, %s37, %s26
    %p39 = scmp.ge.s32.totalorder %s38, 1
    %s40 = scalar_select %p39, 0, %s38
    %s41 = sadd.s32 1, %s25
    %s42 = scalar_select %p39, %s41, %s25
    %p43 = scmp.ge.s32.totalorder %s42, 2
    %s44 = scalar_select %p43, 0, %s42
    %s45 = ssub.s32 %s25, %s44
    %s46 = ssub.s32 %s26, %s40
    %s47 = sor.u32 %s45, %s46
    %p48 = scmp.eq.s32.totalorder %s47, 0
    %s50 = sadd.s32 %s49, 1
    %s51 = scalar_select %p48, %s49, %s50
    %p54 = pneg %p48
    %p55 = scmp.eq.s32.totalorder %s18, 15
    %p56 = por %p54, %p55
    %p57 = scmp.ne.s32.totalorder %s49, %s52
    %p58 = scmp.eq.s32.totalorder %s18, 0
    %p59 = por %p57, %p58
    %p60 = scmp.ne.s32.totalorder %s49, %s52
    %p61 = scmp.eq.s32.totalorder %s23, 15
    %p62 = por %p60, %p61
    %p63 = scmp.ne.s32.totalorder %s52, %s53
    %p64 = scmp.eq.s32.totalorder %s23, 0
    %p65 = por %p63, %p64
    %p66 = scmp.ne.s32.totalorder %s52, %s53
    %p67 = scmp.eq.s32.totalorder %s24, 15
    %p68 = por %p66, %p67
    %p70 = scmp.ne.s32.totalorder %s53, %s69
    %p71 = scmp.eq.s32.totalorder %s24, 0
    %p72 = por %p70, %p71
    %s73 = ssub.s32 %s25, %s44
    %p74 = scmp.eq.s32.totalorder %s73, 0
    %s76 = sadd.s32 %s75, 1
    %s77 = scalar_select %p74, %s75, %s76
    %p80 = pneg %p74
    %p81 = scmp.eq.s32.totalorder %s18, 15
    %p82 = por %p80, %p81
    %p83 = scmp.ne.s32.totalorder %s75, %s78
    %p84 = scmp.eq.s32.totalorder %s18, 0
    %p85 = por %p83, %p84
    %p86 = scmp.ne.s32.totalorder %s75, %s78
    %p87 = scmp.eq.s32.totalorder %s23, 15
    %p88 = por %p86, %p87
    %p89 = scmp.ne.s32.totalorder %s78, %s79
    %p90 = scmp.eq.s32.totalorder %s23, 0
    %p91 = por %p89, %p90
    %p92 = scmp.ne.s32.totalorder %s78, %s79
    %p93 = scmp.eq.s32.totalorder %s24, 15
    %p94 = por %p92, %p93
    %p96 = scmp.ne.s32.totalorder %s79, %s95
    %p97 = scmp.eq.s32.totalorder %s24, 0
    %p98 = por %p96, %p97
    %s99 = ssub.s32 %s27, %s36
    %p100 = scmp.eq.s32.totalorder %s99, 0
    %s102 = sadd.s32 %s101, 1
    %s103 = scalar_select %p100, %s101, %s102
    %p106 = pneg %p100
    %p107 = scmp.eq.s32.totalorder %s18, 15
    %p108 = por %p106, %p107
    %p109 = scmp.ne.s32.totalorder %s101, %s104
    %p110 = scmp.eq.s32.totalorder %s18, 0
    %p111 = por %p109, %p110
    %p112 = scmp.ne.s32.totalorder %s101, %s104
    %p113 = scmp.eq.s32.totalorder %s23, 15
    %p114 = por %p112, %p113
    %p115 = scmp.ne.s32.totalorder %s104, %s105
    %p116 = scmp.eq.s32.totalorder %s23, 0
    %p117 = por %p115, %p116
    %p118 = scmp.ne.s32.totalorder %s104, %s105
    %p119 = scmp.eq.s32.totalorder %s24, 15
    %p120 = por %p118, %p119
    %p122 = scmp.ne.s32.totalorder %s105, %s121
    %p123 = scmp.eq.s32.totalorder %s24, 0
    %p124 = por %p122, %p123
    %s125 = ssub.s32 %s27, %s36
    %p126 = scmp.eq.s32.totalorder %s125, 0
    %s128 = sadd.s32 %s127, 1
    %s129 = scalar_select %p126, %s127, %s128
    %p132 = pneg %p126
    %p133 = scmp.eq.s32.totalorder %s18, 15
    %p134 = por %p132, %p133
    %p135 = scmp.ne.s32.totalorder %s127, %s130
    %p136 = scmp.eq.s32.totalorder %s18, 0
    %p137 = por %p135, %p136
    %p138 = scmp.ne.s32.totalorder %s127, %s130
    %p139 = scmp.eq.s32.totalorder %s23, 15
    %p140 = por %p138, %p139
    %p141 = scmp.ne.s32.totalorder %s130, %s131
    %p142 = scmp.eq.s32.totalorder %s23, 0
    %p143 = por %p141, %p142
    %p144 = scmp.ne.s32.totalorder %s130, %s131
    %p145 = scmp.eq.s32.totalorder %s24, 15
    %p146 = por %p144, %p145
    %p148 = scmp.ne.s32.totalorder %s131, %s147
    %p149 = scmp.eq.s32.totalorder %s24, 0
    %p150 = por %p148, %p149
    %s151 = ssub.s32 %s27, %s36
    %p152 = scmp.eq.s32.totalorder %s151, 0
    %s154 = sadd.s32 %s153, 1
    %s155 = scalar_select %p152, %s153, %s154
    %p158 = pneg %p152
    %p159 = scmp.eq.s32.totalorder %s18, 15
    %p160 = por %p158, %p159
    %p161 = scmp.ne.s32.totalorder %s153, %s156
    %p162 = scmp.eq.s32.totalorder %s18, 0
    %p163 = por %p161, %p162
    %p164 = scmp.ne.s32.totalorder %s153, %s156
    %p165 = scmp.eq.s32.totalorder %s23, 15
    %p166 = por %p164, %p165
    %p167 = scmp.ne.s32.totalorder %s156, %s157
    %p168 = scmp.eq.s32.totalorder %s23, 0
    %p169 = por %p167, %p168
    %p170 = scmp.ne.s32.totalorder %s156, %s157
    %p171 = scmp.eq.s32.totalorder %s24, 15
    %p172 = por %p170, %p171
    %p174 = scmp.ne.s32.totalorder %s157, %s173
    %p175 = scmp.eq.s32.totalorder %s24, 0
    %p176 = por %p174, %p175
    %s177 = ssub.s32 %s27, %s36
    %p178 = scmp.eq.s32.totalorder %s177, 0
    %s180 = sadd.s32 %s179, 1
    %s181 = scalar_select %p178, %s179, %s180
    %p184 = pneg %p178
    %p185 = scmp.eq.s32.totalorder %s18, 15
    %p186 = por %p184, %p185
    %p187 = scmp.ne.s32.totalorder %s179, %s182
    %p188 = scmp.eq.s32.totalorder %s18, 0
    %p189 = por %p187, %p188
    %p190 = scmp.ne.s32.totalorder %s179, %s182
    %p191 = scmp.eq.s32.totalorder %s23, 15
    %p192 = por %p190, %p191
    %p193 = scmp.ne.s32.totalorder %s182, %s183
    %p194 = scmp.eq.s32.totalorder %s23, 0
    %p195 = por %p193, %p194
    %p196 = scmp.ne.s32.totalorder %s182, %s183
    %p197 = scmp.eq.s32.totalorder %s24, 15
    %p198 = por %p196, %p197
    %p200 = scmp.ne.s32.totalorder %s183, %s199
    %p201 = scmp.eq.s32.totalorder %s24, 0
    %p202 = por %p200, %p201
    %s203 = ssub.s32 %s27, %s36
    %p204 = scmp.eq.s32.totalorder %s203, 0
    %s206 = sadd.s32 %s205, 1
    %s207 = scalar_select %p204, %s205, %s206
    %p210 = pneg %p204
    %p211 = scmp.eq.s32.totalorder %s18, 15
    %p212 = por %p210, %p211
    %p213 = scmp.ne.s32.totalorder %s205, %s208
    %p214 = scmp.eq.s32.totalorder %s18, 0
    %p215 = por %p213, %p214
    %p216 = scmp.ne.s32.totalorder %s205, %s208
    %p217 = scmp.eq.s32.totalorder %s23, 15
    %p218 = por %p216, %p217
    %p219 = scmp.ne.s32.totalorder %s208, %s209
    %p220 = scmp.eq.s32.totalorder %s23, 0
    %p221 = por %p219, %p220
    %p222 = scmp.ne.s32.totalorder %s208, %s209
    %p223 = scmp.eq.s32.totalorder %s24, 15
    %p224 = por %p222, %p223
    %p226 = scmp.ne.s32.totalorder %s209, %s225
    %p227 = scmp.eq.s32.totalorder %s24, 0
    %p228 = por %p226, %p227
    %s229 = ssub.s32 %s27, %s36
    %p230 = scmp.eq.s32.totalorder %s229, 0
    %s232 = sadd.s32 %s231, 1
    %s233 = scalar_select %p230, %s231, %s232
    %p236 = pneg %p230
    %p237 = scmp.eq.s32.totalorder %s18, 15
    %p238 = por %p236, %p237
    %p239 = scmp.ne.s32.totalorder %s231, %s234
    %p240 = scmp.eq.s32.totalorder %s18, 0
    %p241 = por %p239, %p240
    %p242 = scmp.ne.s32.totalorder %s231, %s234
    %p243 = scmp.eq.s32.totalorder %s23, 15
    %p244 = por %p242, %p243
    %p245 = scmp.ne.s32.totalorder %s234, %s235
    %p246 = scmp.eq.s32.totalorder %s23, 0
    %p247 = por %p245, %p246
    %p248 = scmp.ne.s32.totalorder %s234, %s235
    %p249 = scmp.eq.s32.totalorder %s24, 15
    %p250 = por %p248, %p249
    %p252 = scmp.ne.s32.totalorder %s235, %s251
    %p253 = scmp.eq.s32.totalorder %s24, 0
    %p254 = por %p252, %p253
    %s255 = ssub.s32 %s27, %s36
    %p256 = scmp.eq.s32.totalorder %s255, 0
    %s258 = sadd.s32 %s257, 1
    %s259 = scalar_select %p256, %s257, %s258
    %p262 = pneg %p256
    %p263 = scmp.eq.s32.totalorder %s18, 15
    %p264 = por %p262, %p263
    %p265 = scmp.ne.s32.totalorder %s257, %s260
    %p266 = scmp.eq.s32.totalorder %s18, 0
    %p267 = por %p265, %p266
    %p268 = scmp.ne.s32.totalorder %s257, %s260
    %p269 = scmp.eq.s32.totalorder %s23, 15
    %p270 = por %p268, %p269
    %p271 = scmp.ne.s32.totalorder %s260, %s261
    %p272 = scmp.eq.s32.totalorder %s23, 0
    %p273 = por %p271, %p272
    %p274 = scmp.ne.s32.totalorder %s260, %s261
    %p275 = scmp.eq.s32.totalorder %s24, 15
    %p276 = por %p274, %p275
    %p278 = scmp.ne.s32.totalorder %s261, %s277
    %p279 = scmp.eq.s32.totalorder %s24, 0
    %p280 = por %p278, %p279
    %s282 = sadd.s32 %s281, 1
    %p285 = scmp.eq.s32.totalorder %s18, 15
    %p286 = scmp.ne.s32.totalorder %s281, %s283
    %p287 = scmp.eq.s32.totalorder %s18, 0
    %p288 = por %p286, %p287
    %p289 = scmp.ne.s32.totalorder %s281, %s283
    %p290 = scmp.eq.s32.totalorder %s23, 15
    %p291 = por %p289, %p290
    %p292 = scmp.ne.s32.totalorder %s283, %s284
    %p293 = scmp.eq.s32.totalorder %s23, 0
    %p294 = por %p292, %p293
    %p295 = scmp.ne.s32.totalorder %s283, %s284
    %p296 = scmp.eq.s32.totalorder %s24, 15
    %p297 = por %p295, %p296
    %p299 = scmp.ne.s32.totalorder %s284, %s298
    %p300 = scmp.eq.s32.totalorder %s24, 0
    %p301 = por %p299, %p300
    %s303 = sadd.s32 %s302, 1
    %p306 = scmp.eq.s32.totalorder %s18, 15
    %p307 = scmp.ne.s32.totalorder %s302, %s304
    %p308 = scmp.eq.s32.totalorder %s18, 0
    %p309 = por %p307, %p308
    %p310 = scmp.ne.s32.totalorder %s302, %s304
    %p311 = scmp.eq.s32.totalorder %s23, 15
    %p312 = por %p310, %p311
    %p313 = scmp.ne.s32.totalorder %s304, %s305
    %p314 = scmp.eq.s32.totalorder %s23, 0
    %p315 = por %p313, %p314
    %p316 = scmp.ne.s32.totalorder %s304, %s305
    %p317 = scmp.eq.s32.totalorder %s24, 15
    %p318 = por %p316, %p317
    %p320 = scmp.ne.s32.totalorder %s305, %s319
    %p321 = scmp.eq.s32.totalorder %s24, 0
    %p322 = por %p320, %p321
    %s324 = sadd.s32 %s323, 1
    %p327 = scmp.eq.s32.totalorder %s18, 15
    %p328 = scmp.ne.s32.totalorder %s323, %s325
    %p329 = scmp.eq.s32.totalorder %s18, 0
    %p330 = por %p328, %p329
    %p331 = scmp.ne.s32.totalorder %s323, %s325
    %p332 = scmp.eq.s32.totalorder %s23, 15
    %p333 = por %p331, %p332
    %p334 = scmp.ne.s32.totalorder %s325, %s326
    %p335 = scmp.eq.s32.totalorder %s23, 0
    %p336 = por %p334, %p335
    %p337 = scmp.ne.s32.totalorder %s325, %s326
    %p338 = scmp.eq.s32.totalorder %s24, 15
    %p339 = por %p337, %p338
    %p341 = scmp.ne.s32.totalorder %s326, %s340
    %p342 = scmp.eq.s32.totalorder %s24, 0
    %p343 = por %p341, %p342
    %s344 = ssub.s32 %s25, %s44
    %s345 = ssub.s32 %s26, %s40
    %s346 = sor.u32 %s344, %s345
    %p347 = scmp.eq.s32.totalorder %s346, 0
    %s349 = sadd.s32 %s348, 1
    %s350 = scalar_select %p347, %s348, %s349
    %p353 = pneg %p347
    %p354 = scmp.eq.s32.totalorder %s18, 15
    %p355 = por %p353, %p354
    %p356 = scmp.ne.s32.totalorder %s348, %s351
    %p357 = scmp.eq.s32.totalorder %s18, 0
    %p358 = por %p356, %p357
    %p359 = scmp.ne.s32.totalorder %s348, %s351
    %p360 = scmp.eq.s32.totalorder %s23, 15
    %p361 = por %p359, %p360
    %p362 = scmp.ne.s32.totalorder %s351, %s352
    %p363 = scmp.eq.s32.totalorder %s23, 0
    %p364 = por %p362, %p363
    %p365 = scmp.ne.s32.totalorder %s351, %s352
    %p366 = scmp.eq.s32.totalorder %s24, 15
    %p367 = por %p365, %p366
    %p369 = scmp.ne.s32.totalorder %s352, %s368
    %p370 = scmp.eq.s32.totalorder %s24, 0
    %p371 = por %p369, %p370
    %p372 = scmp.le.s32.totalorder 1, %s18
    %p373 = scmp.lt.s32.totalorder %s18, 17
    %p374 = pnand %p372, %p373
    %p375 = pneg %p374
    // Predicated region
    $region9: #{v2i_transformer_encoder.5} parent=5 // pred_check
      _
    $region10: #{v2i_transformer_encoder.5} parent=5 // pred_check_branch
      %377 = sbr.rel (%p374) target = $region12
    $region11: #{v2i_transformer_encoder.5} parent=5 // pred_region
      %s378 = ssub.s32 %s18, 1
      // Predicated region
      $region13: #{v2i_transformer_encoder.5} parent=11 // pred_check
        %p379 = pneg %p294
      $region14: #{v2i_transformer_encoder.5} parent=11 // pred_check_branch
        %381 = sbr.rel (%p379) target = $region16
      $region15: #{v2i_transformer_encoder.5} parent=11 // pred_region
        _
      $region16: #{v2i_transformer_encoder.5} parent=11 // pred_fallthru
        _
      // Predicated region
      $region17: #{v2i_transformer_encoder.5} parent=11 // pred_check
        %p382 = pneg %p315
      $region18: #{v2i_transformer_encoder.5} parent=11 // pred_check_branch
        %384 = sbr.rel (%p382) target = $region20
      $region19: #{v2i_transformer_encoder.5} parent=11 // pred_region
        _
      $region20: #{v2i_transformer_encoder.5} parent=11 // pred_fallthru
        _
      // Predicated region
      $region21: #{v2i_transformer_encoder.5} parent=11 // pred_check
        %p385 = pneg %p336
      $region22: #{v2i_transformer_encoder.5} parent=11 // pred_check_branch
        %387 = sbr.rel (%p385) target = $region24
      $region23: #{v2i_transformer_encoder.5} parent=11 // pred_region
        _
      $region24: #{v2i_transformer_encoder.5} parent=11 // pred_fallthru
        _
    $region12: #{v2i_transformer_encoder.5} parent=5 // pred_fallthru
      _
    %p388 = scmp.lt.s32.totalorder %s18, 16
    // Predicated region
    $region25: #{v2i_transformer_encoder.5} parent=5 // pred_check
      %p389 = pneg %p388
    $region26: #{v2i_transformer_encoder.5} parent=5 // pred_check_branch
      %391 = sbr.rel (%p389) target = $region28
    $region27: #{v2i_transformer_encoder.5} parent=5 // pred_region
      // Predicated region
      $region29: #{v2i_transformer_encoder.5} parent=27 // pred_check
        %p392 = pneg %p59
      $region30: #{v2i_transformer_encoder.5} parent=27 // pred_check_branch
        %394 = sbr.rel (%p392) target = $region32
      $region31: #{v2i_transformer_encoder.5} parent=27 // pred_region
        %p395 = scmp.lt.s32.totalorder %s25, 1
        %s396 = scalar_select %p395, %s25, 1
        %p397 = scmp.lt.s32.totalorder %s26, 0
        %s398 = scalar_select %p397, %s26, 0
        %s399 = sadd.s32 %s398, %s396
        %s400 = smul.addr %s399, 4
        %s401 = scalar_lea.vmem %s0, %s400
      $region32: #{v2i_transformer_encoder.5} parent=27 // pred_fallthru
        _
      // Predicated region
      $region33: #{v2i_transformer_encoder.5} parent=27 // pred_check
        %p402 = pneg %p85
      $region34: #{v2i_transformer_encoder.5} parent=27 // pred_check_branch
        %404 = sbr.rel (%p402) target = $region36
      $region35: #{v2i_transformer_encoder.5} parent=27 // pred_region
        %p405 = scmp.lt.s32.totalorder %s25, 1
        %s406 = scalar_select %p405, %s25, 1
        %s407 = smul.addr %s406, 4
        %s408 = scalar_lea.vmem %s1, %s407
      $region36: #{v2i_transformer_encoder.5} parent=27 // pred_fallthru
        _
      // Predicated region
      $region37: #{v2i_transformer_encoder.5} parent=27 // pred_check
        %p409 = pneg %p111
      $region38: #{v2i_transformer_encoder.5} parent=27 // pred_check_branch
        %411 = sbr.rel (%p409) target = $region40
      $region39: #{v2i_transformer_encoder.5} parent=27 // pred_region
        %p412 = scmp.lt.s32.totalorder %s27, 7
        %s413 = scalar_select %p412, %s27, 7
        %s414 = smul.addr %s413, 4
        %s415 = smul.addr %s414, 4
        %s416 = scalar_lea.vmem %s2, %s415
      $region40: #{v2i_transformer_encoder.5} parent=27 // pred_fallthru
        _
      // Predicated region
      $region41: #{v2i_transformer_encoder.5} parent=27 // pred_check
        %p417 = pneg %p137
      $region42: #{v2i_transformer_encoder.5} parent=27 // pred_check_branch
        %419 = sbr.rel (%p417) target = $region44
      $region43: #{v2i_transformer_encoder.5} parent=27 // pred_region
        %p420 = scmp.lt.s32.totalorder %s27, 7
        %s421 = scalar_select %p420, %s27, 7
        %s422 = scalar_lea.vmem %s3, %s421
      $region44: #{v2i_transformer_encoder.5} parent=27 // pred_fallthru
        _
      // Predicated region
      $region45: #{v2i_transformer_encoder.5} parent=27 // pred_check
        %p423 = pneg %p163
      $region46: #{v2i_transformer_encoder.5} parent=27 // pred_check_branch
        %425 = sbr.rel (%p423) target = $region48
      $region47: #{v2i_transformer_encoder.5} parent=27 // pred_region
        %p426 = scmp.lt.s32.totalorder %s27, 7
        %s427 = scalar_select %p426, %s27, 7
        %s428 = smul.addr %s427, 4
        %s429 = smul.addr %s428, 4
        %s430 = scalar_lea.vmem %s4, %s429
      $region48: #{v2i_transformer_encoder.5} parent=27 // pred_fallthru
        _
      // Predicated region
      $region49: #{v2i_transformer_encoder.5} parent=27 // pred_check
        %p431 = pneg %p189
      $region50: #{v2i_transformer_encoder.5} parent=27 // pred_check_branch
        %433 = sbr.rel (%p431) target = $region52
      $region51: #{v2i_transformer_encoder.5} parent=27 // pred_region
        %p434 = scmp.lt.s32.totalorder %s27, 7
        %s435 = scalar_select %p434, %s27, 7
        %s436 = scalar_lea.vmem %s5, %s435
      $region52: #{v2i_transformer_encoder.5} parent=27 // pred_fallthru
        _
      // Predicated region
      $region53: #{v2i_transformer_encoder.5} parent=27 // pred_check
        %p437 = pneg %p215
      $region54: #{v2i_transformer_encoder.5} parent=27 // pred_check_branch
        %439 = sbr.rel (%p437) target = $region56
      $region55: #{v2i_transformer_encoder.5} parent=27 // pred_region
        %p440 = scmp.lt.s32.totalorder %s27, 7
        %s441 = scalar_select %p440, %s27, 7
        %s442 = smul.addr %s441, 4
        %s443 = smul.addr %s442, 4
        %s444 = scalar_lea.vmem %s6, %s443
      $region56: #{v2i_transformer_encoder.5} parent=27 // pred_fallthru
        _
      // Predicated region
      $region57: #{v2i_transformer_encoder.5} parent=27 // pred_check
        %p445 = pneg %p241
      $region58: #{v2i_transformer_encoder.5} parent=27 // pred_check_branch
        %447 = sbr.rel (%p445) target = $region60
      $region59: #{v2i_transformer_encoder.5} parent=27 // pred_region
        %p448 = scmp.lt.s32.totalorder %s27, 7
        %s449 = scalar_select %p448, %s27, 7
        %s450 = scalar_lea.vmem %s7, %s449
      $region60: #{v2i_transformer_encoder.5} parent=27 // pred_fallthru
        _
      // Predicated region
      $region61: #{v2i_transformer_encoder.5} parent=27 // pred_check
        %p451 = pneg %p267
      $region62: #{v2i_transformer_encoder.5} parent=27 // pred_check_branch
        %453 = sbr.rel (%p451) target = $region64
      $region63: #{v2i_transformer_encoder.5} parent=27 // pred_region
        %p454 = scmp.lt.s32.totalorder %s27, 7
        %s455 = scalar_select %p454, %s27, 7
        %s456 = smul.addr %s455, 2
        %s457 = scalar_lea.vmem %s8, %s456
      $region64: #{v2i_transformer_encoder.5} parent=27 // pred_fallthru
        _
    $region28: #{v2i_transformer_encoder.5} parent=5 // pred_fallthru
      _
    %p458 = scmp.le.s32.totalorder 1, %s18
    %p459 = scmp.lt.s32.totalorder %s18, 17
    %p460 = pnand %p458, %p459
    %p461 = pneg %p460
    // Predicated region
    $region65: #{v2i_transformer_encoder.5} parent=5 // pred_check
      _
    $region66: #{v2i_transformer_encoder.5} parent=5 // pred_check_branch
      %463 = sbr.rel (%p460) target = $region68
    $region67: #{v2i_transformer_encoder.5} parent=5 // pred_region
      %s464 = ssub.s32 %s18, 1
      %p465 = scmp.lt.s32.totalorder %s28, 1
      %s466 = scalar_select %p465, %s28, 1
      %p467 = scmp.lt.s32.totalorder %s29, 0
      %s468 = scalar_select %p467, %s29, 0
      %s469 = sadd.s32 %s468, %s466
      %s470 = smul.addr %s469, 4
      %s471 = scalar_lea.vmem %s0, %s470
      %p472 = pneg %p65
      %p473 = pneg %p62
      %p474 = scmp.lt.s32.totalorder %s28, 1
      %s475 = scalar_select %p474, %s28, 1
      %s476 = smul.addr %s475, 4
      %s477 = scalar_lea.vmem %s1, %s476
      %p478 = pneg %p91
      %p479 = pneg %p88
      %p480 = scmp.lt.s32.totalorder %s30, 7
      %s481 = scalar_select %p480, %s30, 7
      %s482 = smul.addr %s481, 4
      %s483 = smul.addr %s482, 4
      %s484 = scalar_lea.vmem %s2, %s483
      %p485 = pneg %p117
      %p486 = pneg %p114
      %p487 = scmp.lt.s32.totalorder %s30, 7
      %s488 = scalar_select %p487, %s30, 7
      %s489 = scalar_lea.vmem %s3, %s488
      %p490 = pneg %p143
      %p491 = pneg %p140
      %p492 = scmp.lt.s32.totalorder %s30, 7
      %s493 = scalar_select %p492, %s30, 7
      %s494 = smul.addr %s493, 4
      %s495 = smul.addr %s494, 4
      %s496 = scalar_lea.vmem %s4, %s495
      %p497 = pneg %p169
      %p498 = pneg %p166
      %p499 = scmp.lt.s32.totalorder %s30, 7
      %s500 = scalar_select %p499, %s30, 7
      %s501 = scalar_lea.vmem %s5, %s500
      %p502 = pneg %p195
      %p503 = pneg %p192
      %p504 = scmp.lt.s32.totalorder %s30, 7
      %s505 = scalar_select %p504, %s30, 7
      %s506 = smul.addr %s505, 4
      %s507 = smul.addr %s506, 4
      %s508 = scalar_lea.vmem %s6, %s507
      %p509 = pneg %p221
      %p510 = pneg %p218
      %p511 = scmp.lt.s32.totalorder %s30, 7
      %s512 = scalar_select %p511, %s30, 7
      %s513 = scalar_lea.vmem %s7, %s512
      %p514 = pneg %p247
      %p515 = pneg %p244
      %p516 = scmp.lt.s32.totalorder %s30, 7
      %s517 = scalar_select %p516, %s30, 7
      %s518 = smul.addr %s517, 2
      %s519 = scalar_lea.vmem %s8, %s518
      %p520 = pneg %p273
      %p521 = pneg %p270
      %p522 = pneg %p294
      %p523 = pneg %p291
      %p524 = pneg %p315
      %p525 = pneg %p312
      %p526 = pneg %p336
      %p527 = pneg %p333
      %p528 = pneg %p364
      %p529 = pneg %p361
      %p530 = scmp.lt.s32.totalorder %s28, 1
      %s531 = scalar_select %p530, %s28, 1
      %p532 = scmp.lt.s32.totalorder %s29, 0
      %s533 = scalar_select %p532, %s29, 0
      %s534 = sadd.s32 %s533, %s531
      %s535 = smul.addr %s534, 4
      %s536 = scalar_lea.vmem %s12, %s535
      %p537 = scmp.lt.s32.totalorder %s28, 1
      %s538 = scalar_select %p537, %s28, 1
      %p539 = scmp.lt.s32.totalorder %s29, 0
      %s540 = scalar_select %p539, %s29, 0
      %s541 = sadd.s32 %s540, %s538
      %s542 = smul.addr %s541, 4
      %s543 = scalar_lea.vmem %s0, %s542
      %p544 = scmp.lt.s32.totalorder %s28, 1
      %s545 = scalar_select %p544, %s28, 1
      %s546 = smul.addr %s545, 4
      %s547 = scalar_lea.vmem %s1, %s546
      %p548 = scmp.lt.s32.totalorder %s30, 7
      %s549 = scalar_select %p548, %s30, 7
      %s550 = smul.addr %s549, 4
      %s551 = smul.addr %s550, 4
      %s552 = scalar_lea.vmem %s2, %s551
      %p553 = scmp.lt.s32.totalorder %s30, 7
      %s554 = scalar_select %p553, %s30, 7
      %s555 = scalar_lea.vmem %s3, %s554
      %p556 = scmp.lt.s32.totalorder %s30, 7
      %s557 = scalar_select %p556, %s30, 7
      %s558 = smul.addr %s557, 4
      %s559 = smul.addr %s558, 4
      %s560 = scalar_lea.vmem %s4, %s559
      %p561 = scmp.lt.s32.totalorder %s30, 7
      %s562 = scalar_select %p561, %s30, 7
      %s563 = scalar_lea.vmem %s5, %s562
      %p564 = scmp.lt.s32.totalorder %s30, 7
      %s565 = scalar_select %p564, %s30, 7
      %s566 = smul.addr %s565, 4
      %s567 = smul.addr %s566, 4
      %s568 = scalar_lea.vmem %s6, %s567
      %p569 = scmp.lt.s32.totalorder %s30, 7
      %s570 = scalar_select %p569, %s30, 7
      %s571 = scalar_lea.vmem %s7, %s570
      %p572 = scmp.lt.s32.totalorder %s30, 7
      %s573 = scalar_select %p572, %s30, 7
      %s574 = smul.addr %s573, 2
      %s575 = scalar_lea.vmem %s8, %s574
      %p576 = scmp.lt.s32.totalorder %s28, 1
      %s577 = scalar_select %p576, %s28, 1
      %p578 = scmp.lt.s32.totalorder %s29, 0
      %s579 = scalar_select %p578, %s29, 0
      %s580 = sadd.s32 %s579, %s577
      %s581 = smul.addr %s580, 4
      %s582 = scalar_lea.vmem %s12, %s581
      %p584 = scmp.eq.s32.totalorder %s30, 0
      // Predicated region
      $region69: #{v2i_transformer_encoder.5} parent=67 // pred_check
        %p585 = pneg %p584
      $region70: #{v2i_transformer_encoder.5} parent=67 // pred_check_branch
        %587 = sbr.rel (%p585) target = $region72
      $region71: #{v2i_transformer_encoder.5} parent=67 // pred_region
        %vm588 = vcmask 261120
        %589 = vst.msk [vmem:[#allocation2] sm:$0xff] %vm588, 0.0
      $region72: #{v2i_transformer_encoder.5} parent=67 // pred_fallthru
        _
      %v590 = vld [vmem:[%s543] sm:$0xf]
      %v591 = vld [vmem:[%s547] sm:$0xf]
      %v592 = vld [vmem:[%s552] sm:$0xf]
      %v593 = vld [vmem:[%s552 + $0x4] sm:$0xf]
      %v594 = vld [vmem:[%s552 + $0x8] sm:$0xf]
      %v595 = vld [vmem:[%s552 + $0xc] sm:$0xf]
      %v596 = vld [vmem:[%s560] sm:$0xf]
      %v597 = vld [vmem:[%s560 + $0x4] sm:$0xf]
      %v598 = vld [vmem:[%s560 + $0x8] sm:$0xf]
      %v599 = vld [vmem:[%s560 + $0xc] sm:$0xf]
      %v600 = vld [vmem:[%s568] sm:$0xf]
      %v601 = vld [vmem:[%s568 + $0x4] sm:$0xf]
      %v602 = vld [vmem:[%s568 + $0x8] sm:$0xf]
      %v603 = vld [vmem:[%s568 + $0xc] sm:$0xf]
      %v604 = vld [vmem:[%s575] sm:$0x3]
      %v605 = vld [vmem:[%s555] sm:$0x1]
      %v607 = vlaneseq
      %v608 = vshrl.u32 %v607, 7
      %v609 = vsub.s32 0, %v608
      %v610 = vrot.slane %v605, %v609
      %v616 = vunpack.c.l.b16 %v592
      %v617 = vunpack.c.l.b16 %v593
      %v618 = vunpack.c.l.b16 %v594
      %v619 = vunpack.c.l.b16 %v595
      %v620 = vpack.c.b16 %v617, %v616
      %v621 = vpack.c.b16 %v619, %v618
      %vm624 = vcmask 261120
      %v626 = vsel %vm624, %v590, 0
      %628 = vmatprep.subr.bf16.mxu0 0
      %629 = vmatpush1.bf16.msra.mxu0 0
      %630 = vmatprep.subr.bf16.mxu0 0
      %631 = vmatpush1.bf16.msra.mxu0 0
      %632 = vmatprep.subr.bf16.mxu0 0
      %633 = vmatpush1.bf16.msra.mxu0 0
      %634 = vmatprep.subr.bf16.mxu0 0
      %635 = vmatpush1.bf16.msra.mxu0 0
      %636 = vmatprep.subr.bf16.mxu0 0
      %637 = vmatpush1.bf16.msra.mxu0 0
      %638 = vmatprep.subr.bf16.mxu0 0
      %639 = vmatpush1.bf16.msra.mxu0 0
      %640 = vmatprep.subr.bf16.mxu0 0
      %641 = vmatpush1.bf16.msra.mxu0 %v621
      %642 = vmatprep.subr.bf16.mxu0 0
      %643 = vmatpush1.bf16.msra.mxu0 %v620
      %644 = vmatprep.subr.bf16.mxu0 0
      %645 = vmatpush2.bf16.msra.mxu0 0
      %646 = vmatprep.subr.bf16.mxu0 0
      %647 = vmatpush2.bf16.msra.mxu0 0
      %648 = vmatprep.subr.bf16.mxu0 0
      %649 = vmatpush2.bf16.msra.mxu0 0
      %650 = vmatprep.subr.bf16.mxu0 0
      %651 = vmatpush2.bf16.msra.mxu0 0
      %652 = vmatprep.subr.bf16.mxu0 0
      %653 = vmatpush2.bf16.msra.mxu0 0
      %654 = vmatprep.subr.bf16.mxu0 0
      %655 = vmatpush2.bf16.msra.mxu0 0
      %656 = vmatprep.subr.bf16.mxu0 0
      %657 = vmatpush2.bf16.msra.mxu0 0
      %658 = vmatprep.subr.bf16.mxu0 0
      %659 = vmatpush2.bf16.msra.mxu0 0
      %660 = vmatprep.mubr.bf16.mxu0 0
      %661 = vmatmul.mubr.bf16.gmra.mxu0 %v626
      %v662 = vpop.f32.mrf.mxu0
      %v663 = vadd.f32 %v610, %v662
      %v664 = vpop.f32.mrf.mxu0
      %v665 = vpop.f32.mrf.mxu0
      %v666 = vpop.f32.mrf.mxu0
      %667 = vdwg.mxu0
      %v668 = vld [vmem:[%s563] sm:$0x1]
      %v670 = vlaneseq
      %v671 = vshrl.u32 %v670, 7
      %v672 = vsub.s32 0, %v671
      %v673 = vrot.slane %v668, %v672
      %v679 = vunpack.c.l.b16 %v596
      %v680 = vunpack.c.l.b16 %v597
      %v681 = vunpack.c.l.b16 %v598
      %v682 = vunpack.c.l.b16 %v599
      %v683 = vpack.c.b16 %v680, %v679
      %v684 = vpack.c.b16 %v682, %v681
      %v688 = vsel %vm624, %v591, 0
      %690 = vmatprep.subr.bf16.mxu0 0
      %691 = vmatpush1.bf16.msra.mxu0 0
      %692 = vmatprep.subr.bf16.mxu0 0
      %693 = vmatpush1.bf16.msra.mxu0 0
      %694 = vmatprep.subr.bf16.mxu0 0
      %695 = vmatpush1.bf16.msra.mxu0 0
      %696 = vmatprep.subr.bf16.mxu0 0
      %697 = vmatpush1.bf16.msra.mxu0 0
      %698 = vmatprep.subr.bf16.mxu0 0
      %699 = vmatpush1.bf16.msra.mxu0 0
      %700 = vmatprep.subr.bf16.mxu0 0
      %701 = vmatpush1.bf16.msra.mxu0 0
      %702 = vmatprep.subr.bf16.mxu0 0
      %703 = vmatpush1.bf16.msra.mxu0 %v684
      %704 = vmatprep.subr.bf16.mxu0 0
      %705 = vmatpush1.bf16.msra.mxu0 %v683
      %706 = vmatprep.subr.bf16.mxu0 0
      %707 = vmatpush2.bf16.msra.mxu0 0
      %708 = vmatprep.subr.bf16.mxu0 0
      %709 = vmatpush2.bf16.msra.mxu0 0
      %710 = vmatprep.subr.bf16.mxu0 0
      %711 = vmatpush2.bf16.msra.mxu0 0
      %712 = vmatprep.subr.bf16.mxu0 0
      %713 = vmatpush2.bf16.msra.mxu0 0
      %714 = vmatprep.subr.bf16.mxu0 0
      %715 = vmatpush2.bf16.msra.mxu0 0
      %716 = vmatprep.subr.bf16.mxu0 0
      %717 = vmatpush2.bf16.msra.mxu0 0
      %718 = vmatprep.subr.bf16.mxu0 0
      %719 = vmatpush2.bf16.msra.mxu0 0
      %720 = vmatprep.subr.bf16.mxu0 0
      %721 = vmatpush2.bf16.msra.mxu0 0
      %722 = vmatprep.mubr.bf16.mxu0 0
      %723 = vmatmul.mubr.bf16.gmra.mxu0 %v688
      %v724 = vpop.f32.mrf.mxu0
      %v725 = vadd.f32 %v673, %v724
      %v726 = vpop.f32.mrf.mxu0
      %v727 = vpop.f32.mrf.mxu0
      %v728 = vpop.f32.mrf.mxu0
      %729 = vdwg.mxu0
      %v730 = vld [vmem:[%s571] sm:$0x1]
      %v732 = vlaneseq
      %v733 = vshrl.u32 %v732, 7
      %v734 = vsub.s32 0, %v733
      %v735 = vrot.slane %v730, %v734
      %v741 = vunpack.c.l.b16 %v600
      %v742 = vunpack.c.l.b16 %v601
      %v743 = vunpack.c.l.b16 %v602
      %v744 = vunpack.c.l.b16 %v603
      %v745 = vpack.c.b16 %v742, %v741
      %v746 = vpack.c.b16 %v744, %v743
      %749 = vmatprep.subr.bf16.mxu0 0
      %750 = vmatpush1.bf16.msra.mxu0 0
      %751 = vmatprep.subr.bf16.mxu0 0
      %752 = vmatpush1.bf16.msra.mxu0 0
      %753 = vmatprep.subr.bf16.mxu0 0
      %754 = vmatpush1.bf16.msra.mxu0 0
      %755 = vmatprep.subr.bf16.mxu0 0
      %756 = vmatpush1.bf16.msra.mxu0 0
      %757 = vmatprep.subr.bf16.mxu0 0
      %758 = vmatpush1.bf16.msra.mxu0 0
      %759 = vmatprep.subr.bf16.mxu0 0
      %760 = vmatpush1.bf16.msra.mxu0 0
      %761 = vmatprep.subr.bf16.mxu0 0
      %762 = vmatpush1.bf16.msra.mxu0 %v746
      %763 = vmatprep.subr.bf16.mxu0 0
      %764 = vmatpush1.bf16.msra.mxu0 %v745
      %765 = vmatprep.subr.bf16.mxu0 0
      %766 = vmatpush2.bf16.msra.mxu0 0
      %767 = vmatprep.subr.bf16.mxu0 0
      %768 = vmatpush2.bf16.msra.mxu0 0
      %769 = vmatprep.subr.bf16.mxu0 0
      %770 = vmatpush2.bf16.msra.mxu0 0
      %771 = vmatprep.subr.bf16.mxu0 0
      %772 = vmatpush2.bf16.msra.mxu0 0
      %773 = vmatprep.subr.bf16.mxu0 0
      %774 = vmatpush2.bf16.msra.mxu0 0
      %775 = vmatprep.subr.bf16.mxu0 0
      %776 = vmatpush2.bf16.msra.mxu0 0
      %777 = vmatprep.subr.bf16.mxu0 0
      %778 = vmatpush2.bf16.msra.mxu0 0
      %779 = vmatprep.subr.bf16.mxu0 0
      %780 = vmatpush2.bf16.msra.mxu0 0
      %781 = vmatprep.mubr.bf16.mxu0 0
      %782 = vmatmul.mubr.bf16.gmra.mxu0 %v688
      %v783 = vpop.f32.mrf.mxu0
      %v784 = vadd.f32 %v735, %v783
      %v785 = vpop.f32.mrf.mxu0
      %v786 = vpop.f32.mrf.mxu0
      %v787 = vpop.f32.mrf.mxu0
      %788 = vdwg.mxu0
      %v789 = vmul.f32 %v663, 0.5
      %v790 = vpack.c.bf16 %v789, %v789
      %v791 = vpack.c.bf16 %v725, %v725
      %vm792 = vcmask 31744
      %v794 = vsel %vm792, %v790, 0
      %v797 = vsel %vm792, %v791, 0
      %799 = vmatprep.subr.bf16.mxu0 0
      %800 = vmatpush1.bf16.xpose.msra.mxu0 0
      %801 = vmatprep.subr.bf16.mxu0 0
      %802 = vmatpush1.bf16.xpose.msra.mxu0 0
      %803 = vmatprep.subr.bf16.mxu0 0
      %804 = vmatpush1.bf16.xpose.msra.mxu0 0
      %805 = vmatprep.subr.bf16.mxu0 0
      %806 = vmatpush1.bf16.xpose.msra.mxu0 0
      %807 = vmatprep.subr.bf16.mxu0 0
      %808 = vmatpush1.bf16.xpose.msra.mxu0 0
      %809 = vmatprep.subr.bf16.mxu0 0
      %810 = vmatpush1.bf16.xpose.msra.mxu0 0
      %811 = vmatprep.subr.bf16.mxu0 0
      %812 = vmatpush1.bf16.xpose.msra.mxu0 0
      %813 = vmatprep.subr.bf16.mxu0 0
      %814 = vmatpush1.bf16.xpose.msra.mxu0 %v797
      %815 = vmatprep.subr.bf16.mxu0 0
      %816 = vmatpush2.bf16.xpose.msra.mxu0 0
      %817 = vmatprep.subr.bf16.mxu0 0
      %818 = vmatpush2.bf16.xpose.msra.mxu0 0
      %819 = vmatprep.subr.bf16.mxu0 0
      %820 = vmatpush2.bf16.xpose.msra.mxu0 0
      %821 = vmatprep.subr.bf16.mxu0 0
      %822 = vmatpush2.bf16.xpose.msra.mxu0 0
      %823 = vmatprep.subr.bf16.mxu0 0
      %824 = vmatpush2.bf16.xpose.msra.mxu0 0
      %825 = vmatprep.subr.bf16.mxu0 0
      %826 = vmatpush2.bf16.xpose.msra.mxu0 0
      %827 = vmatprep.subr.bf16.mxu0 0
      %828 = vmatpush2.bf16.xpose.msra.mxu0 0
      %829 = vmatprep.subr.bf16.mxu0 0
      %830 = vmatpush2.bf16.xpose.msra.mxu0 0
      %831 = vmatprep.mubr.bf16.mxu0 0
      %832 = vmatmul.mubr.bf16.gmra.mxu0 %v794
      %v833 = vpop.f32.mrf.mxu0
      %v834 = vadd.f32 0.0, %v833
      %v835 = vpop.f32.mrf.mxu0
      %v836 = vpop.f32.mrf.mxu0
      %v837 = vpop.f32.mrf.mxu0
      %838 = vdwg.mxu0
      %vm839 = vcmask 64512
      %v840 = vsel %vm839, %v834, -inf
      %841 = vmax.xlane.f32.xlu0 %v840
      %v842 = vpop.xlane.xlu0 %841
      %v843 = vsub.f32 %v834, %v842
      %v844 = vmul.f32 %v843, 1.442695
      %v845 = vpow.pop %v844
      %v846 = vsel %vm839, %v845, 0.0
      %847 = vadd.xlane.f32.xlu0 %v846
      %v848 = vpop.xlane.xlu0 %847
      %v849 = vrcp.pop %v848
      %v850 = vmul.f32 %v845, %v849
      %v851 = vpack.c.bf16 %v850, %v850
      %v852 = vpack.c.bf16 %v784, %v784
      %v854 = vsel %vm839, %v851, 0
      %vm856 = vcmask 1043456
      %v858 = vsel %vm856, %v852, 0
      %860 = vmatprep.subr.bf16.mxu0 0
      %861 = vmatpush1.bf16.msra.mxu0 0
      %862 = vmatprep.subr.bf16.mxu0 0
      %863 = vmatpush1.bf16.msra.mxu0 0
      %864 = vmatprep.subr.bf16.mxu0 0
      %865 = vmatpush1.bf16.msra.mxu0 0
      %866 = vmatprep.subr.bf16.mxu0 0
      %867 = vmatpush1.bf16.msra.mxu0 0
      %868 = vmatprep.subr.bf16.mxu0 0
      %869 = vmatpush1.bf16.msra.mxu0 0
      %870 = vmatprep.subr.bf16.mxu0 0
      %871 = vmatpush1.bf16.msra.mxu0 0
      %872 = vmatprep.subr.bf16.mxu0 0
      %873 = vmatpush1.bf16.msra.mxu0 0
      %874 = vmatprep.subr.bf16.mxu0 0
      %875 = vmatpush1.bf16.msra.mxu0 %v858
      %876 = vmatprep.subr.bf16.mxu0 0
      %877 = vmatpush2.bf16.msra.mxu0 0
      %878 = vmatprep.subr.bf16.mxu0 0
      %879 = vmatpush2.bf16.msra.mxu0 0
      %880 = vmatprep.subr.bf16.mxu0 0
      %881 = vmatpush2.bf16.msra.mxu0 0
      %882 = vmatprep.subr.bf16.mxu0 0
      %883 = vmatpush2.bf16.msra.mxu0 0
      %884 = vmatprep.subr.bf16.mxu0 0
      %885 = vmatpush2.bf16.msra.mxu0 0
      %886 = vmatprep.subr.bf16.mxu0 0
      %887 = vmatpush2.bf16.msra.mxu0 0
      %888 = vmatprep.subr.bf16.mxu0 0
      %889 = vmatpush2.bf16.msra.mxu0 0
      %890 = vmatprep.subr.bf16.mxu0 0
      %891 = vmatpush2.bf16.msra.mxu0 0
      %892 = vmatprep.mubr.bf16.mxu0 0
      %893 = vmatmul.mubr.bf16.gmra.mxu0 %v854
      %v894 = vpop.f32.mrf.mxu0
      %v895 = vadd.f32 0.0, %v894
      %v896 = vpop.f32.mrf.mxu0
      %v897 = vpop.f32.mrf.mxu0
      %v898 = vpop.f32.mrf.mxu0
      %899 = vdwg.mxu0
      %v900 = vld [vmem:[#allocation2] sm:$0xff]
      %v901 = vpack.c.bf16 %v895, %v895
      %v903 = vsel %vm792, %v901, 0
      %vm905 = vcmask 1041408
      %v907 = vsel %vm905, %v604, 0
      %909 = vmatprep.subr.bf16.mxu0 0
      %910 = vmatpush1.bf16.msra.mxu0 0
      %911 = vmatprep.subr.bf16.mxu0 0
      %912 = vmatpush1.bf16.msra.mxu0 0
      %913 = vmatprep.subr.bf16.mxu0 0
      %914 = vmatpush1.bf16.msra.mxu0 0
      %915 = vmatprep.subr.bf16.mxu0 0
      %916 = vmatpush1.bf16.msra.mxu0 0
      %917 = vmatprep.subr.bf16.mxu0 0
      %918 = vmatpush1.bf16.msra.mxu0 0
      %919 = vmatprep.subr.bf16.mxu0 0
      %920 = vmatpush1.bf16.msra.mxu0 0
      %921 = vmatprep.subr.bf16.mxu0 0
      %922 = vmatpush1.bf16.msra.mxu0 0
      %923 = vmatprep.subr.bf16.mxu0 0
      %924 = vmatpush1.bf16.msra.mxu0 %v907
      %925 = vmatprep.subr.bf16.mxu0 0
      %926 = vmatpush2.bf16.msra.mxu0 0
      %927 = vmatprep.subr.bf16.mxu0 0
      %928 = vmatpush2.bf16.msra.mxu0 0
      %929 = vmatprep.subr.bf16.mxu0 0
      %930 = vmatpush2.bf16.msra.mxu0 0
      %931 = vmatprep.subr.bf16.mxu0 0
      %932 = vmatpush2.bf16.msra.mxu0 0
      %933 = vmatprep.subr.bf16.mxu0 0
      %934 = vmatpush2.bf16.msra.mxu0 0
      %935 = vmatprep.subr.bf16.mxu0 0
      %936 = vmatpush2.bf16.msra.mxu0 0
      %937 = vmatprep.subr.bf16.mxu0 0
      %938 = vmatpush2.bf16.msra.mxu0 0
      %939 = vmatprep.subr.bf16.mxu0 0
      %940 = vmatpush2.bf16.msra.mxu0 0
      %941 = vmatprep.mubr.bf16.mxu0 0
      %942 = vmatmul.mubr.bf16.gmra.mxu0 %v903
      %v943 = vpop.f32.mrf.mxu0
      %v944 = vadd.f32 0.0, %v943
      %v945 = vpop.f32.mrf.mxu0
      %v946 = vpop.f32.mrf.mxu0
      %v947 = vpop.f32.mrf.mxu0
      %948 = vdwg.mxu0
      %v949 = vadd.f32 %v900, %v944
      %950 = vst.msk [vmem:[#allocation2] sm:$0xff] %vm624, %v949
      %p951 = scmp.eq.s32.totalorder %s30, 7
      // Predicated region
      $region73: #{v2i_transformer_encoder.5} parent=67 // pred_check
        %p952 = pneg %p951
      $region74: #{v2i_transformer_encoder.5} parent=67 // pred_check_branch
        %954 = sbr.rel (%p952) target = $region76
      $region75: #{v2i_transformer_encoder.5} parent=67 // pred_region
        %v955 = vunpack.c.l.bf16 %v590
        %v956 = vld [vmem:[#allocation2] sm:$0xff]
        %v957 = vadd.f32 %v955, %v956
        %v958 = vld [vmem:[%s9] sm:$0x1]
        %v960 = vlaneseq
        %v961 = vshrl.u32 %v960, 7
        %v962 = vsub.s32 0, %v961
        %v963 = vrot.slane %v958, %v962
        %v965 = vadd.f32 %v957, %v963
        %v966 = vld [vmem:[%s10] sm:$0x1]
        %v967 = vld [vmem:[%s11] sm:$0x1]
        %v968 = vsel %vm624, %v965, 0.0
        %969 = vadd.xlane.f32.xlu0 %v968
        %v970 = vpop.xlane.xlu0 %969
        %v971 = vrcp.pop 32.0
        %v972 = vmul.f32 %v970, %v971
        %v973 = vsub.f32 %v965, %v972
        %v974 = vmul.f32 %v973, %v973
        %v975 = vsel %vm624, %v974, 0.0
        %976 = vadd.xlane.f32.xlu0 %v975
        %v977 = vpop.xlane.xlu0 %976
        %v978 = vmul.f32 %v977, %v971
        %v979 = vadd.f32 %v978, 1e-05
        %v980 = vrsqrt.pop %v979
        %v981 = vmul.f32 %v973, %v980
        %v983 = vlaneseq
        %v984 = vshrl.u32 %v983, 7
        %v985 = vsub.s32 0, %v984
        %v986 = vrot.slane %v966, %v985
        %v988 = vmul.f32 %v981, %v986
        %v990 = vlaneseq
        %v991 = vshrl.u32 %v990, 7
        %v992 = vsub.s32 0, %v991
        %v993 = vrot.slane %v967, %v992
        %v995 = vadd.f32 %v988, %v993
        %v996 = vpack.c.bf16 %v995, %v995
        %vm997 = vcmask 257024
        %998 = vst.msk [vmem:[%s582] sm:$0xf] %vm997, %v996
      $region76: #{v2i_transformer_encoder.5} parent=67 // pred_fallthru
        _
      %p999 = scmp.lt.s32.totalorder %s28, 1
      %s1000 = scalar_select %p999, %s28, 1
      %p1001 = scmp.lt.s32.totalorder %s29, 0
      %s1002 = scalar_select %p1001, %s29, 0
      %s1003 = sadd.s32 %s1002, %s1000
      %s1004 = smul.addr %s1003, 4
      %s1005 = scalar_lea.vmem %s12, %s1004
      // Predicated region
      $region77: #{v2i_transformer_encoder.5} parent=67 // pred_check
        %p1006 = pneg %p361
      $region78: #{v2i_transformer_encoder.5} parent=67 // pred_check_branch
        %1008 = sbr.rel (%p1006) target = $region80
      $region79: #{v2i_transformer_encoder.5} parent=67 // pred_region
        _
      $region80: #{v2i_transformer_encoder.5} parent=67 // pred_fallthru
        _
    $region68: #{v2i_transformer_encoder.5} parent=5 // pred_fallthru
      _
    %p1009 = scmp.le.s32.totalorder 2, %s18
    // Predicated region
    $region81: #{v2i_transformer_encoder.5} parent=5 // pred_check
      %p1010 = pneg %p1009
    $region82: #{v2i_transformer_encoder.5} parent=5 // pred_check_branch
      %1012 = sbr.rel (%p1010) target = $region84
    $region83: #{v2i_transformer_encoder.5} parent=5 // pred_region
      %s1013 = ssub.s32 %s18, 2
      // Predicated region
      $region85: #{v2i_transformer_encoder.5} parent=83 // pred_check
        %p1014 = pneg %p367
      $region86: #{v2i_transformer_encoder.5} parent=83 // pred_check_branch
        %1016 = sbr.rel (%p1014) target = $region88
      $region87: #{v2i_transformer_encoder.5} parent=83 // pred_region
        %p1017 = scmp.lt.s32.totalorder %s31, 1
        %s1018 = scalar_select %p1017, %s31, 1
        %p1019 = scmp.lt.s32.totalorder %s32, 0
        %s1020 = scalar_select %p1019, %s32, 0
        %s1021 = sadd.s32 %s1020, %s1018
        %s1022 = smul.addr %s1021, 4
        %s1023 = scalar_lea.vmem %s12, %s1022
      $region88: #{v2i_transformer_encoder.5} parent=83 // pred_fallthru
        _
    $region84: #{v2i_transformer_encoder.5} parent=5 // pred_fallthru
      _
  $region6: #{v2i_transformer_encoder.5} parent=0 // loop_footer
    %s22 = sadd.s32 1, %s18
  $region7: #{v2i_transformer_encoder.5} parent=0 // loop_footer_branch
    %17 = sbr.rel target = $region3
  $region8: #{v2i_transformer_encoder.5} parent=0 // loop_exit
    _

// kernel: v2i_transformer_encoder.6
$region0: #{v2i_transformer_encoder.6}
  #allocation0 [shape = 'u32[]', space=smem, size = 0x4, offset = 0x4, fixed_abs, tag = 'smem constant byte address 0x4 - core index']
  #allocation1 [shape = 'u32[144,128]{1,0:T(1,128)}', space=vmem, size = 0x12000, scoped, tag = 'internal scratch']
  %s0 = inlined_call_operand.vmem [shape: bf16[16,32], index: 0, kind: input, shape index: {}]
  %s1 = inlined_call_operand.vmem [shape: bf16[32,128], index: 1, kind: input, shape index: {}]
  %s2 = inlined_call_operand.vmem [shape: f32[1,128], index: 2, kind: input, shape index: {}]
  %s3 = inlined_call_operand.vmem [shape: bf16[128,32], index: 3, kind: input, shape index: {}]
  %s4 = inlined_call_operand.vmem [shape: f32[1,32], index: 4, kind: input, shape index: {}]
  %s5 = inlined_call_operand.vmem [shape: f32[1,32], index: 5, kind: input, shape index: {}]
  %s6 = inlined_call_operand.vmem [shape: f32[1,32], index: 6, kind: input, shape index: {}]
  %s7 = inlined_call_operand.vmem [shape: bf16[16,32], index: 7, kind: output, shape index: {}]
  %s8 = sld [smem:[#allocation0]]
  $region38: #{v2i_transformer_encoder.6} parent=0
    _
  %s10 = ssub.s32 1, %s8
  %s11 = scalar_select 0, %s10, %s8
  // Predicated region
  $region2: #{v2i_transformer_encoder.6} parent=0 // pred_check
    _
  $region3: #{v2i_transformer_encoder.6} parent=0 // pred_check_branch
    %13 = sbr.rel (0) target = $region5
  $region4: #{v2i_transformer_encoder.6} parent=0 // pred_region
    _
  $region5: #{v2i_transformer_encoder.6} parent=0 // pred_fallthru
    _
  // Predicated region
  $region6: #{v2i_transformer_encoder.6} parent=0 // pred_check
    _
  $region7: #{v2i_transformer_encoder.6} parent=0 // pred_check_branch
    %15 = sbr.rel (0) target = $region9
  $region8: #{v2i_transformer_encoder.6} parent=0 // pred_region
    _
  $region9: #{v2i_transformer_encoder.6} parent=0 // pred_fallthru
    _
  // Predicated region
  $region10: #{v2i_transformer_encoder.6} parent=0 // pred_check
    _
  $region11: #{v2i_transformer_encoder.6} parent=0 // pred_check_branch
    %17 = sbr.rel (0) target = $region13
  $region12: #{v2i_transformer_encoder.6} parent=0 // pred_region
    _
  $region13: #{v2i_transformer_encoder.6} parent=0 // pred_fallthru
    _
  // Predicated region
  $region14: #{v2i_transformer_encoder.6} parent=0 // pred_check
    _
  $region15: #{v2i_transformer_encoder.6} parent=0 // pred_check_branch
    %19 = sbr.rel (0) target = $region17
  $region16: #{v2i_transformer_encoder.6} parent=0 // pred_region
    _
  $region17: #{v2i_transformer_encoder.6} parent=0 // pred_fallthru
    _
  // Predicated region
  $region18: #{v2i_transformer_encoder.6} parent=0 // pred_check
    _
  $region19: #{v2i_transformer_encoder.6} parent=0 // pred_check_branch
    %21 = sbr.rel (0) target = $region21
  $region20: #{v2i_transformer_encoder.6} parent=0 // pred_region
    _
  $region21: #{v2i_transformer_encoder.6} parent=0 // pred_fallthru
    _
  // Predicated region
  $region22: #{v2i_transformer_encoder.6} parent=0 // pred_check
    _
  $region23: #{v2i_transformer_encoder.6} parent=0 // pred_check_branch
    %23 = sbr.rel (0) target = $region25
  $region24: #{v2i_transformer_encoder.6} parent=0 // pred_region
    _
  $region25: #{v2i_transformer_encoder.6} parent=0 // pred_fallthru
    _
  // Predicated region
  $region26: #{v2i_transformer_encoder.6} parent=0 // pred_check
    _
  $region27: #{v2i_transformer_encoder.6} parent=0 // pred_check_branch
    %25 = sbr.rel (0) target = $region29
  $region28: #{v2i_transformer_encoder.6} parent=0 // pred_region
    _
  $region29: #{v2i_transformer_encoder.6} parent=0 // pred_fallthru
    _
  %v27 = vld [vmem:[%s0] sm:$0xf]
  %v28 = vld [vmem:[%s0 + $0x4] sm:$0xf]
  %v29 = vld [vmem:[%s1] sm:$0xf]
  %v30 = vld [vmem:[%s1 + $0x4] sm:$0xf]
  %v31 = vld [vmem:[%s1 + $0x8] sm:$0xf]
  %v32 = vld [vmem:[%s1 + $0xc] sm:$0xf]
  %v33 = vld [vmem:[%s3] sm:$0xf]
  %v34 = vld [vmem:[%s3 + $0x4] sm:$0xf]
  %v35 = vld [vmem:[%s3 + $0x8] sm:$0xf]
  %v36 = vld [vmem:[%s3 + $0xc] sm:$0xf]
  %v37 = vld [vmem:[%s3 + $0x10] sm:$0xf]
  %v38 = vld [vmem:[%s3 + $0x14] sm:$0xf]
  %v39 = vld [vmem:[%s3 + $0x18] sm:$0xf]
  %v40 = vld [vmem:[%s3 + $0x1c] sm:$0xf]
  %v41 = vld [vmem:[%s3 + $0x20] sm:$0xf]
  %v42 = vld [vmem:[%s3 + $0x24] sm:$0xf]
  %v43 = vld [vmem:[%s3 + $0x28] sm:$0xf]
  %v44 = vld [vmem:[%s3 + $0x2c] sm:$0xf]
  %v45 = vld [vmem:[%s3 + $0x30] sm:$0xf]
  %v46 = vld [vmem:[%s3 + $0x34] sm:$0xf]
  %v47 = vld [vmem:[%s3 + $0x38] sm:$0xf]
  %v48 = vld [vmem:[%s3 + $0x3c] sm:$0xf]
  %v49 = vld [vmem:[%s2] sm:$0x1]
  %v51 = vlaneseq
  %v52 = vshrl.u32 %v51, 7
  %v53 = vsub.s32 0, %v52
  %v54 = vrot.slane %v49, %v53
  %v58 = vunpack.c.l.b16 %v27
  %v59 = vunpack.c.l.b16 %v28
  %v60 = vpack.c.b16 %v59, %v58
  %v65 = vunpack.c.l.b16 %v29
  %v66 = vunpack.c.l.b16 %v30
  %v67 = vunpack.c.l.b16 %v31
  %v68 = vunpack.c.l.b16 %v32
  %v69 = vpack.c.b16 %v66, %v65
  %v70 = vpack.c.b16 %v68, %v67
  %vm73 = vcmask 261120
  %v75 = vsel %vm73, %v60, 0
  %77 = vmatprep.subr.bf16.mxu0 0
  %78 = vmatpush1.bf16.msra.mxu0 0
  %79 = vmatprep.subr.bf16.mxu0 0
  %80 = vmatpush1.bf16.msra.mxu0 0
  %81 = vmatprep.subr.bf16.mxu0 0
  %82 = vmatpush1.bf16.msra.mxu0 0
  %83 = vmatprep.subr.bf16.mxu0 0
  %84 = vmatpush1.bf16.msra.mxu0 0
  %85 = vmatprep.subr.bf16.mxu0 0
  %86 = vmatpush1.bf16.msra.mxu0 0
  %87 = vmatprep.subr.bf16.mxu0 0
  %88 = vmatpush1.bf16.msra.mxu0 0
  %89 = vmatprep.subr.bf16.mxu0 0
  %90 = vmatpush1.bf16.msra.mxu0 %v70
  %91 = vmatprep.subr.bf16.mxu0 0
  %92 = vmatpush1.bf16.msra.mxu0 %v69
  %93 = vmatprep.subr.bf16.mxu0 0
  %94 = vmatpush2.bf16.msra.mxu0 0
  %95 = vmatprep.subr.bf16.mxu0 0
  %96 = vmatpush2.bf16.msra.mxu0 0
  %97 = vmatprep.subr.bf16.mxu0 0
  %98 = vmatpush2.bf16.msra.mxu0 0
  %99 = vmatprep.subr.bf16.mxu0 0
  %100 = vmatpush2.bf16.msra.mxu0 0
  %101 = vmatprep.subr.bf16.mxu0 0
  %102 = vmatpush2.bf16.msra.mxu0 0
  %103 = vmatprep.subr.bf16.mxu0 0
  %104 = vmatpush2.bf16.msra.mxu0 0
  %105 = vmatprep.subr.bf16.mxu0 0
  %106 = vmatpush2.bf16.msra.mxu0 0
  %107 = vmatprep.subr.bf16.mxu0 0
  %108 = vmatpush2.bf16.msra.mxu0 0
  %109 = vmatprep.mubr.bf16.mxu0 0
  %110 = vmatmul.mubr.bf16.gmra.mxu0 %v75
  %v111 = vpop.f32.mrf.mxu0
  %v112 = vadd.f32 %v54, %v111
  %v113 = vpop.f32.mrf.mxu0
  %v114 = vpop.f32.mrf.mxu0
  %v115 = vadd.f32 %v54, %v114
  %v116 = vpop.f32.mrf.mxu0
  %117 = vdwg.mxu0
  %v118 = vmax.f32 %v112, 0.0
  %v119 = vmax.f32 %v115, 0.0
  %v120 = vpack.c.bf16 %v119, %v118
  %v121 = vld [vmem:[%s4] sm:$0x1]
  %v123 = vlaneseq
  %v124 = vshrl.u32 %v123, 7
  %v125 = vsub.s32 0, %v124
  %v126 = vrot.slane %v121, %v125
  %v144 = vunpack.c.l.b16 %v33
  %v145 = vunpack.c.l.b16 %v34
  %v146 = vunpack.c.l.b16 %v35
  %v147 = vunpack.c.l.b16 %v36
  %v148 = vunpack.c.l.b16 %v37
  %v149 = vunpack.c.l.b16 %v38
  %v150 = vunpack.c.l.b16 %v39
  %v151 = vunpack.c.l.b16 %v40
  %v152 = vunpack.c.l.b16 %v41
  %v153 = vunpack.c.l.b16 %v42
  %v154 = vunpack.c.l.b16 %v43
  %v155 = vunpack.c.l.b16 %v44
  %v156 = vunpack.c.l.b16 %v45
  %v157 = vunpack.c.l.b16 %v46
  %v158 = vunpack.c.l.b16 %v47
  %v159 = vunpack.c.l.b16 %v48
  %v160 = vpack.c.b16 %v145, %v144
  %v161 = vpack.c.b16 %v147, %v146
  %v162 = vpack.c.b16 %v149, %v148
  %v163 = vpack.c.b16 %v151, %v150
  %v164 = vpack.c.b16 %v153, %v152
  %v165 = vpack.c.b16 %v155, %v154
  %v166 = vpack.c.b16 %v157, %v156
  %v167 = vpack.c.b16 %v159, %v158
  %176 = vmatprep.subr.bf16.mxu0 0
  %177 = vmatpush1.bf16.msra.mxu0 %v167
  %178 = vmatprep.subr.bf16.mxu0 0
  %179 = vmatpush1.bf16.msra.mxu0 %v166
  %180 = vmatprep.subr.bf16.mxu0 0
  %181 = vmatpush1.bf16.msra.mxu0 %v165
  %182 = vmatprep.subr.bf16.mxu0 0
  %183 = vmatpush1.bf16.msra.mxu0 %v164
  %184 = vmatprep.subr.bf16.mxu0 0
  %185 = vmatpush1.bf16.msra.mxu0 %v163
  %186 = vmatprep.subr.bf16.mxu0 0
  %187 = vmatpush1.bf16.msra.mxu0 %v162
  %188 = vmatprep.subr.bf16.mxu0 0
  %189 = vmatpush1.bf16.msra.mxu0 %v161
  %190 = vmatprep.subr.bf16.mxu0 0
  %191 = vmatpush1.bf16.msra.mxu0 %v160
  %192 = vmatprep.subr.bf16.mxu0 0
  %193 = vmatpush2.bf16.msra.mxu0 0
  %194 = vmatprep.subr.bf16.mxu0 0
  %195 = vmatpush2.bf16.msra.mxu0 0
  %196 = vmatprep.subr.bf16.mxu0 0
  %197 = vmatpush2.bf16.msra.mxu0 0
  %198 = vmatprep.subr.bf16.mxu0 0
  %199 = vmatpush2.bf16.msra.mxu0 0
  %200 = vmatprep.subr.bf16.mxu0 0
  %201 = vmatpush2.bf16.msra.mxu0 0
  %202 = vmatprep.subr.bf16.mxu0 0
  %203 = vmatpush2.bf16.msra.mxu0 0
  %204 = vmatprep.subr.bf16.mxu0 0
  %205 = vmatpush2.bf16.msra.mxu0 0
  %206 = vmatprep.subr.bf16.mxu0 0
  %207 = vmatpush2.bf16.msra.mxu0 0
  %208 = vmatprep.mubr.bf16.mxu0 0
  %209 = vmatmul.mubr.bf16.gmra.mxu0 %v120
  %v210 = vpop.f32.mrf.mxu0
  %v211 = vadd.f32 %v126, %v210
  %v212 = vpop.f32.mrf.mxu0
  %v213 = vpop.f32.mrf.mxu0
  %v214 = vadd.f32 %v126, %v213
  %v215 = vpop.f32.mrf.mxu0
  %216 = vdwg.mxu0
  %v217 = vunpack.c.l.bf16 %v27
  %v218 = vunpack.c.l.bf16 %v28
  %v219 = vadd.f32 %v217, %v211
  %v220 = vadd.f32 %v218, %v214
  %v221 = vld [vmem:[%s5] sm:$0x1]
  %v222 = vld [vmem:[%s6] sm:$0x1]
  %v223 = vsel %vm73, %v219, 0.0
  %224 = vadd.xlane.f32.xlu0 %v223
  %v225 = vpop.xlane.xlu0 %224
  %v226 = vsel %vm73, %v220, 0.0
  %227 = vadd.xlane.f32.xlu0 %v226
  %v228 = vpop.xlane.xlu0 %227
  %v229 = vrcp.pop 32.0
  %v230 = vmul.f32 %v225, %v229
  %v231 = vmul.f32 %v228, %v229
  %v232 = vsub.f32 %v219, %v230
  %v233 = vsub.f32 %v220, %v231
  %v234 = vmul.f32 %v232, %v232
  %v235 = vmul.f32 %v233, %v233
  %v236 = vsel %vm73, %v234, 0.0
  %237 = vadd.xlane.f32.xlu0 %v236
  %v238 = vpop.xlane.xlu0 %237
  %v239 = vsel %vm73, %v235, 0.0
  %240 = vadd.xlane.f32.xlu0 %v239
  %v241 = vpop.xlane.xlu0 %240
  %v242 = vmul.f32 %v238, %v229
  %v243 = vmul.f32 %v241, %v229
  %v244 = vadd.f32 %v242, 1e-05
  %v245 = vadd.f32 %v243, 1e-05
  %v246 = vrsqrt.pop %v244
  %v247 = vrsqrt.pop %v245
  %v248 = vmul.f32 %v232, %v246
  %v249 = vmul.f32 %v233, %v247
  %v251 = vlaneseq
  %v252 = vshrl.u32 %v251, 7
  %v253 = vsub.s32 0, %v252
  %v254 = vrot.slane %v221, %v253
  %v256 = vmul.f32 %v248, %v254
  %v257 = vmul.f32 %v249, %v254
  %v259 = vlaneseq
  %v260 = vshrl.u32 %v259, 7
  %v261 = vsub.s32 0, %v260
  %v262 = vrot.slane %v222, %v261
  %v264 = vadd.f32 %v256, %v262
  %v265 = vadd.f32 %v257, %v262
  %v266 = vpack.c.bf16 %v265, %v264
  %v268 = vunpack.c.l.b16 %v266
  %v269 = vunpack.c.h.b16 %v266
  %v270 = vpack.c.b16 %v268, %v268
  %v271 = vpack.c.b16 %v269, %v269
  %vm274 = vcmask 257024
  %275 = vst.msk [vmem:[%s7] sm:$0xf] %vm274, %v270
  %276 = vst.msk [vmem:[%s7 + $0x4] sm:$0xf] %vm274, %v271
  // Predicated region
  $region30: #{v2i_transformer_encoder.6} parent=0 // pred_check
    _
  $region31: #{v2i_transformer_encoder.6} parent=0 // pred_check_branch
    %278 = sbr.rel (0) target = $region33
  $region32: #{v2i_transformer_encoder.6} parent=0 // pred_region
    _
  $region33: #{v2i_transformer_encoder.6} parent=0 // pred_fallthru
    _
  // Predicated region
  $region34: #{v2i_transformer_encoder.6} parent=0 // pred_check
    _
  $region35: #{v2i_transformer_encoder.6} parent=0 // pred_check_branch
    %280 = sbr.rel (0) target = $region37
  $region36: #{v2i_transformer_encoder.6} parent=0 // pred_region
    _
  $region37: #{v2i_transformer_encoder.6} parent=0 // pred_fallthru
    _

// kernel: v2i_transformer_encoder.9
$region0: #{v2i_transformer_encoder.9}
  #allocation0 [shape = 'u32[]', space=smem, size = 0x4, offset = 0x4, fixed_abs, tag = 'smem constant byte address 0x4 - core index']
  #allocation1 [shape = 'u32[144,128]{1,0:T(1,128)}', space=vmem, size = 0x12000, scoped, tag = 'internal scratch']
  #allocation2 [shape = 'f32[2,32]{1,0:T(2,128)}', space=vmem, size = 0x400, scoped, tag = 'scratch operand']
  #allocation3 [shape = 'f32[1,1]{1,0:T(1,128)S(1)}', space=vmem, size = 0x200, scoped, tag = 'scoped memory for v2i_transformer_encoder.9']
  %s0 = inlined_call_operand.vmem [shape: bf16[2,8,32], index: 0, kind: input, shape index: {}]
  %s1 = inlined_call_operand.vmem [shape: f32[32,16], index: 1, kind: input, shape index: {}]
  %s2 = inlined_call_operand.vmem [shape: f32[1,16], index: 2, kind: input, shape index: {}]
  %s3 = inlined_call_operand.vmem [shape: f32[16,8], index: 3, kind: input, shape index: {}]
  %s4 = inlined_call_operand.vmem [shape: f32[1,8], index: 4, kind: input, shape index: {}]
  %s5 = inlined_call_operand.vmem [shape: f32[8,1], index: 5, kind: input, shape index: {}]
  %s6 = inlined_call_operand.<no memory space> [shape: f32[1,1], index: 6, kind: input, shape index: {}]
  %s7 = inlined_call_operand.vmem [shape: f32[2,1], index: 7, kind: output, shape index: {}]
  %s8 = sld [smem:[#allocation0]]
  $region46: #{v2i_transformer_encoder.9} parent=0
    _
  %s10 = ssub.s32 1, %s8
  %s11 = scalar_select 0, %s10, %s8
  %v12 = vstv %s6
  %13 = vst [vmem:[#allocation3] sm:$0x1] %v12
  // Predicated region
  $region2: #{v2i_transformer_encoder.9} parent=0 // pred_check
    _
  $region3: #{v2i_transformer_encoder.9} parent=0 // pred_check_branch
    %15 = sbr.rel (0) target = $region5
  $region4: #{v2i_transformer_encoder.9} parent=0 // pred_region
    _
  $region5: #{v2i_transformer_encoder.9} parent=0 // pred_fallthru
    _
  // Predicated region
  $region6: #{v2i_transformer_encoder.9} parent=0 // pred_check
    _
  $region7: #{v2i_transformer_encoder.9} parent=0 // pred_check_branch
    %17 = sbr.rel (0) target = $region9
  $region8: #{v2i_transformer_encoder.9} parent=0 // pred_region
    _
  $region9: #{v2i_transformer_encoder.9} parent=0 // pred_fallthru
    _
  // Predicated region
  $region10: #{v2i_transformer_encoder.9} parent=0 // pred_check
    _
  $region11: #{v2i_transformer_encoder.9} parent=0 // pred_check_branch
    %19 = sbr.rel (0) target = $region13
  $region12: #{v2i_transformer_encoder.9} parent=0 // pred_region
    _
  $region13: #{v2i_transformer_encoder.9} parent=0 // pred_fallthru
    _
  // Predicated region
  $region14: #{v2i_transformer_encoder.9} parent=0 // pred_check
    _
  $region15: #{v2i_transformer_encoder.9} parent=0 // pred_check_branch
    %21 = sbr.rel (0) target = $region17
  $region16: #{v2i_transformer_encoder.9} parent=0 // pred_region
    _
  $region17: #{v2i_transformer_encoder.9} parent=0 // pred_fallthru
    _
  // Predicated region
  $region18: #{v2i_transformer_encoder.9} parent=0 // pred_check
    _
  $region19: #{v2i_transformer_encoder.9} parent=0 // pred_check_branch
    %23 = sbr.rel (0) target = $region21
  $region20: #{v2i_transformer_encoder.9} parent=0 // pred_region
    _
  $region21: #{v2i_transformer_encoder.9} parent=0 // pred_fallthru
    _
  // Predicated region
  $region22: #{v2i_transformer_encoder.9} parent=0 // pred_check
    _
  $region23: #{v2i_transformer_encoder.9} parent=0 // pred_check_branch
    %25 = sbr.rel (0) target = $region25
  $region24: #{v2i_transformer_encoder.9} parent=0 // pred_region
    _
  $region25: #{v2i_transformer_encoder.9} parent=0 // pred_fallthru
    _
  // Predicated region
  $region26: #{v2i_transformer_encoder.9} parent=0 // pred_check
    _
  $region27: #{v2i_transformer_encoder.9} parent=0 // pred_check_branch
    %27 = sbr.rel (0) target = $region29
  $region28: #{v2i_transformer_encoder.9} parent=0 // pred_region
    _
  $region29: #{v2i_transformer_encoder.9} parent=0 // pred_fallthru
    _
  %p28 = scmp.eq.s32.totalorder 0, 0
  // Predicated region
  $region30: #{v2i_transformer_encoder.9} parent=0 // pred_check
    %p29 = pneg %p28
  $region31: #{v2i_transformer_encoder.9} parent=0 // pred_check_branch
    %31 = sbr.rel (%p29) target = $region33
  $region32: #{v2i_transformer_encoder.9} parent=0 // pred_region
    %vm32 = vcmask 254976
    %33 = vst.msk [vmem:[#allocation2] sm:$0x3] %vm32, 0.0
  $region33: #{v2i_transformer_encoder.9} parent=0 // pred_fallthru
    _
  %v34 = vld [vmem:[%s0] sm:$0xf]
  %v35 = vld [vmem:[%s0 + $0x4] sm:$0xf]
  %v36 = vunpack.c.l.bf16 %v34
  %v37 = vunpack.c.l.bf16 %v35
  %s38 = smul.u32 0, 8
  %v39 = vlaneseq
  %v40 = vshrl.u32 %v39, 7
  %v41 = vstv %s38
  %v42 = vadd.s32 %v41, %v40
  %vm43 = vcmp.lt.s32.totalorder %v42, 8
  %v44 = vsel %vm43, 1, 0
  %vm45 = vcmp.eq.s32.totalorder %v44, 1
  %v46 = vsel %vm45, %v36, 0.0
  %v47 = vsel %vm45, %v37, 0.0
  %v48 = vld [vmem:[#allocation2] sm:$0x3]
  %vm49 = vcmask 261120
  %v50 = vsel %vm49, %v46, 0.0
  %v51 = vrot.slane %v50, 4
  %v52 = vadd.f32 %v50, %v51
  %v53 = vrot.slane %v52, 2
  %v54 = vadd.f32 %v52, %v53
  %v55 = vrot.slane %v54, 1
  %v56 = vadd.f32 %v54, %v55
  %v57 = vsel %vm49, %v47, 0.0
  %v58 = vrot.slane %v57, 4
  %v59 = vadd.f32 %v57, %v58
  %v60 = vrot.slane %v59, 2
  %v61 = vadd.f32 %v59, %v60
  %v62 = vrot.slane %v61, 1
  %v63 = vadd.f32 %v61, %v62
  %vm66 = vcmask 1041409
  %v67 = vsel %vm66, %v63, %v56
  %v69 = vadd.f32 %v48, %v67
  %vm70 = vcmask 254976
  %71 = vst.msk [vmem:[#allocation2] sm:$0x3] %vm70, %v69
  // Predicated region
  $region34: #{v2i_transformer_encoder.9} parent=0 // pred_check
    %p72 = pneg %p28
  $region35: #{v2i_transformer_encoder.9} parent=0 // pred_check_branch
    %74 = sbr.rel (%p72) target = $region37
  $region36: #{v2i_transformer_encoder.9} parent=0 // pred_region
    %v75 = vld [vmem:[#allocation2] sm:$0x3]
    %v76 = vmul.f32 %v75, 0.125
    %v77 = vld [vmem:[%s1] sm:$0xff]
    %v78 = vld [vmem:[%s1 + $0x8] sm:$0xff]
    %v79 = vld [vmem:[%s1 + $0x10] sm:$0xff]
    %v80 = vld [vmem:[%s1 + $0x18] sm:$0xff]
    %v81 = vld [vmem:[%s2] sm:$0x1]
    %v83 = vlaneseq
    %v84 = vshrl.u32 %v83, 7
    %v85 = vsub.s32 0, %v84
    %v86 = vrot.slane %v81, %v85
    %v89 = vsel %vm49, %v76, 0
    %91 = vmatprep.subr.mxu0 0.0
    %92 = vmatpush1.msra.mxu0 0.0
    %93 = vmatprep.subr.mxu0 0.0
    %94 = vmatpush1.msra.mxu0 0.0
    %95 = vmatprep.subr.mxu0 0.0
    %96 = vmatpush1.msra.mxu0 0.0
    %97 = vmatprep.subr.mxu0 0.0
    %98 = vmatpush1.msra.mxu0 0.0
    %99 = vmatprep.subr.mxu0 0.0
    %100 = vmatpush1.msra.mxu0 0.0
    %101 = vmatprep.subr.mxu0 0.0
    %102 = vmatpush1.msra.mxu0 0.0
    %103 = vmatprep.subr.mxu0 0.0
    %104 = vmatpush1.msra.mxu0 0.0
    %105 = vmatprep.subr.mxu0 0.0
    %106 = vmatpush1.msra.mxu0 0.0
    %107 = vmatprep.subr.mxu0 0.0
    %108 = vmatpush1.msra.mxu0 0.0
    %109 = vmatprep.subr.mxu0 0.0
    %110 = vmatpush1.msra.mxu0 0.0
    %111 = vmatprep.subr.mxu0 0.0
    %112 = vmatpush1.msra.mxu0 0.0
    %113 = vmatprep.subr.mxu0 0.0
    %114 = vmatpush1.msra.mxu0 0.0
    %115 = vmatprep.subr.mxu0 0.0
    %116 = vmatpush1.msra.mxu0 %v80
    %117 = vmatprep.subr.mxu0 0.0
    %118 = vmatpush1.msra.mxu0 %v79
    %119 = vmatprep.subr.mxu0 0.0
    %120 = vmatpush1.msra.mxu0 %v78
    %121 = vmatprep.subr.mxu0 0.0
    %122 = vmatpush1.msra.mxu0 %v77
    %123 = vmatprep.subr.mxu0 0.0
    %124 = vmatpush2.msra.mxu0 0.0
    %125 = vmatprep.subr.mxu0 0.0
    %126 = vmatpush2.msra.mxu0 0.0
    %127 = vmatprep.subr.mxu0 0.0
    %128 = vmatpush2.msra.mxu0 0.0
    %129 = vmatprep.subr.mxu0 0.0
    %130 = vmatpush2.msra.mxu0 0.0
    %131 = vmatprep.subr.mxu0 0.0
    %132 = vmatpush2.msra.mxu0 0.0
    %133 = vmatprep.subr.mxu0 0.0
    %134 = vmatpush2.msra.mxu0 0.0
    %135 = vmatprep.subr.mxu0 0.0
    %136 = vmatpush2.msra.mxu0 0.0
    %137 = vmatprep.subr.mxu0 0.0
    %138 = vmatpush2.msra.mxu0 0.0
    %139 = vmatprep.subr.mxu0 0.0
    %140 = vmatpush2.msra.mxu0 0.0
    %141 = vmatprep.subr.mxu0 0.0
    %142 = vmatpush2.msra.mxu0 0.0
    %143 = vmatprep.subr.mxu0 0.0
    %144 = vmatpush2.msra.mxu0 0.0
    %145 = vmatprep.subr.mxu0 0.0
    %146 = vmatpush2.msra.mxu0 0.0
    %147 = vmatprep.subr.mxu0 0.0
    %148 = vmatpush2.msra.mxu0 0.0
    %149 = vmatprep.subr.mxu0 0.0
    %150 = vmatpush2.msra.mxu0 0.0
    %151 = vmatprep.subr.mxu0 0.0
    %152 = vmatpush2.msra.mxu0 0.0
    %153 = vmatprep.subr.mxu0 0.0
    %154 = vmatpush2.msra.mxu0 0.0
    %155 = vmatprep.mubr.f32.mxu0 0.0
    %156 = vmatmul.mubr.f32.gmra.mxu0 %v89
    %v157 = vpop.f32.mrf.mxu0
    %v158 = vadd.f32 %v86, %v157
    %v159 = vpop.f32.mrf.mxu0
    %160 = vdwg.mxu0
    %v161 = vmax.f32 %v158, 0.0
    %v162 = vld [vmem:[%s3] sm:$0xff]
    %v163 = vld [vmem:[%s3 + $0x8] sm:$0xff]
    %v164 = vld [vmem:[%s4] sm:$0x1]
    %v166 = vlaneseq
    %v167 = vshrl.u32 %v166, 7
    %v168 = vsub.s32 0, %v167
    %v169 = vrot.slane %v164, %v168
    %vm171 = vcmask 130048
    %v173 = vsel %vm171, %v161, 0
    %175 = vmatprep.subr.mxu0 0.0
    %176 = vmatpush1.msra.mxu0 0.0
    %177 = vmatprep.subr.mxu0 0.0
    %178 = vmatpush1.msra.mxu0 0.0
    %179 = vmatprep.subr.mxu0 0.0
    %180 = vmatpush1.msra.mxu0 0.0
    %181 = vmatprep.subr.mxu0 0.0
    %182 = vmatpush1.msra.mxu0 0.0
    %183 = vmatprep.subr.mxu0 0.0
    %184 = vmatpush1.msra.mxu0 0.0
    %185 = vmatprep.subr.mxu0 0.0
    %186 = vmatpush1.msra.mxu0 0.0
    %187 = vmatprep.subr.mxu0 0.0
    %188 = vmatpush1.msra.mxu0 0.0
    %189 = vmatprep.subr.mxu0 0.0
    %190 = vmatpush1.msra.mxu0 0.0
    %191 = vmatprep.subr.mxu0 0.0
    %192 = vmatpush1.msra.mxu0 0.0
    %193 = vmatprep.subr.mxu0 0.0
    %194 = vmatpush1.msra.mxu0 0.0
    %195 = vmatprep.subr.mxu0 0.0
    %196 = vmatpush1.msra.mxu0 0.0
    %197 = vmatprep.subr.mxu0 0.0
    %198 = vmatpush1.msra.mxu0 0.0
    %199 = vmatprep.subr.mxu0 0.0
    %200 = vmatpush1.msra.mxu0 0.0
    %201 = vmatprep.subr.mxu0 0.0
    %202 = vmatpush1.msra.mxu0 0.0
    %203 = vmatprep.subr.mxu0 0.0
    %204 = vmatpush1.msra.mxu0 %v163
    %205 = vmatprep.subr.mxu0 0.0
    %206 = vmatpush1.msra.mxu0 %v162
    %207 = vmatprep.subr.mxu0 0.0
    %208 = vmatpush2.msra.mxu0 0.0
    %209 = vmatprep.subr.mxu0 0.0
    %210 = vmatpush2.msra.mxu0 0.0
    %211 = vmatprep.subr.mxu0 0.0
    %212 = vmatpush2.msra.mxu0 0.0
    %213 = vmatprep.subr.mxu0 0.0
    %214 = vmatpush2.msra.mxu0 0.0
    %215 = vmatprep.subr.mxu0 0.0
    %216 = vmatpush2.msra.mxu0 0.0
    %217 = vmatprep.subr.mxu0 0.0
    %218 = vmatpush2.msra.mxu0 0.0
    %219 = vmatprep.subr.mxu0 0.0
    %220 = vmatpush2.msra.mxu0 0.0
    %221 = vmatprep.subr.mxu0 0.0
    %222 = vmatpush2.msra.mxu0 0.0
    %223 = vmatprep.subr.mxu0 0.0
    %224 = vmatpush2.msra.mxu0 0.0
    %225 = vmatprep.subr.mxu0 0.0
    %226 = vmatpush2.msra.mxu0 0.0
    %227 = vmatprep.subr.mxu0 0.0
    %228 = vmatpush2.msra.mxu0 0.0
    %229 = vmatprep.subr.mxu0 0.0
    %230 = vmatpush2.msra.mxu0 0.0
    %231 = vmatprep.subr.mxu0 0.0
    %232 = vmatpush2.msra.mxu0 0.0
    %233 = vmatprep.subr.mxu0 0.0
    %234 = vmatpush2.msra.mxu0 0.0
    %235 = vmatprep.subr.mxu0 0.0
    %236 = vmatpush2.msra.mxu0 0.0
    %237 = vmatprep.subr.mxu0 0.0
    %238 = vmatpush2.msra.mxu0 0.0
    %239 = vmatprep.mubr.f32.mxu0 0.0
    %240 = vmatmul.mubr.f32.gmra.mxu0 %v173
    %v241 = vpop.f32.mrf.mxu0
    %v242 = vadd.f32 %v169, %v241
    %v243 = vpop.f32.mrf.mxu0
    %244 = vdwg.mxu0
    %v245 = vmax.f32 %v242, 0.0
    %v246 = vld [vmem:[%s5] sm:$0xff]
    %v247 = vld [vmem:[#allocation3] sm:$0x1]
    %v249 = vlaneseq
    %v250 = vshrl.u32 %v249, 7
    %v251 = vsub.s32 0, %v250
    %v252 = vrot.slane %v247, %v251
    %vm254 = vcmask 64512
    %v256 = vsel %vm254, %v245, 0
    %258 = vmatprep.subr.mxu0 0.0
    %259 = vmatpush1.msra.mxu0 0.0
    %260 = vmatprep.subr.mxu0 0.0
    %261 = vmatpush1.msra.mxu0 0.0
    %262 = vmatprep.subr.mxu0 0.0
    %263 = vmatpush1.msra.mxu0 0.0
    %264 = vmatprep.subr.mxu0 0.0
    %265 = vmatpush1.msra.mxu0 0.0
    %266 = vmatprep.subr.mxu0 0.0
    %267 = vmatpush1.msra.mxu0 0.0
    %268 = vmatprep.subr.mxu0 0.0
    %269 = vmatpush1.msra.mxu0 0.0
    %270 = vmatprep.subr.mxu0 0.0
    %271 = vmatpush1.msra.mxu0 0.0
    %272 = vmatprep.subr.mxu0 0.0
    %273 = vmatpush1.msra.mxu0 0.0
    %274 = vmatprep.subr.mxu0 0.0
    %275 = vmatpush1.msra.mxu0 0.0
    %276 = vmatprep.subr.mxu0 0.0
    %277 = vmatpush1.msra.mxu0 0.0
    %278 = vmatprep.subr.mxu0 0.0
    %279 = vmatpush1.msra.mxu0 0.0
    %280 = vmatprep.subr.mxu0 0.0
    %281 = vmatpush1.msra.mxu0 0.0
    %282 = vmatprep.subr.mxu0 0.0
    %283 = vmatpush1.msra.mxu0 0.0
    %284 = vmatprep.subr.mxu0 0.0
    %285 = vmatpush1.msra.mxu0 0.0
    %286 = vmatprep.subr.mxu0 0.0
    %287 = vmatpush1.msra.mxu0 0.0
    %288 = vmatprep.subr.mxu0 0.0
    %289 = vmatpush1.msra.mxu0 %v246
    %290 = vmatprep.subr.mxu0 0.0
    %291 = vmatpush2.msra.mxu0 0.0
    %292 = vmatprep.subr.mxu0 0.0
    %293 = vmatpush2.msra.mxu0 0.0
    %294 = vmatprep.subr.mxu0 0.0
    %295 = vmatpush2.msra.mxu0 0.0
    %296 = vmatprep.subr.mxu0 0.0
    %297 = vmatpush2.msra.mxu0 0.0
    %298 = vmatprep.subr.mxu0 0.0
    %299 = vmatpush2.msra.mxu0 0.0
    %300 = vmatprep.subr.mxu0 0.0
    %301 = vmatpush2.msra.mxu0 0.0
    %302 = vmatprep.subr.mxu0 0.0
    %303 = vmatpush2.msra.mxu0 0.0
    %304 = vmatprep.subr.mxu0 0.0
    %305 = vmatpush2.msra.mxu0 0.0
    %306 = vmatprep.subr.mxu0 0.0
    %307 = vmatpush2.msra.mxu0 0.0
    %308 = vmatprep.subr.mxu0 0.0
    %309 = vmatpush2.msra.mxu0 0.0
    %310 = vmatprep.subr.mxu0 0.0
    %311 = vmatpush2.msra.mxu0 0.0
    %312 = vmatprep.subr.mxu0 0.0
    %313 = vmatpush2.msra.mxu0 0.0
    %314 = vmatprep.subr.mxu0 0.0
    %315 = vmatpush2.msra.mxu0 0.0
    %316 = vmatprep.subr.mxu0 0.0
    %317 = vmatpush2.msra.mxu0 0.0
    %318 = vmatprep.subr.mxu0 0.0
    %319 = vmatpush2.msra.mxu0 0.0
    %320 = vmatprep.subr.mxu0 0.0
    %321 = vmatpush2.msra.mxu0 0.0
    %322 = vmatprep.mubr.f32.mxu0 0.0
    %323 = vmatmul.mubr.f32.gmra.mxu0 %v256
    %v324 = vpop.f32.mrf.mxu0
    %v325 = vadd.f32 %v252, %v324
    %v326 = vpop.f32.mrf.mxu0
    %327 = vdwg.mxu0
    %v328 = vxor.u32 %v325, 2147483648
    %v329 = vmul.f32 %v328, 1.442695
    %v330 = vpow.pop %v329
    %v331 = vadd.f32 %v330, 1.0
    %v332 = vrcp.pop %v331
    %v333 = vmul.f32 1.0, %v332
    %vm334 = vcmask 1024
    %335 = vst.msk [vmem:[%s7] sm:$0x3] %vm334, %v333
  $region37: #{v2i_transformer_encoder.9} parent=0 // pred_fallthru
    _
  // Predicated region
  $region38: #{v2i_transformer_encoder.9} parent=0 // pred_check
    _
  $region39: #{v2i_transformer_encoder.9} parent=0 // pred_check_branch
    %337 = sbr.rel (0) target = $region41
  $region40: #{v2i_transformer_encoder.9} parent=0 // pred_region
    _
  $region41: #{v2i_transformer_encoder.9} parent=0 // pred_fallthru
    _
  // Predicated region
  $region42: #{v2i_transformer_encoder.9} parent=0 // pred_check
    _
  $region43: #{v2i_transformer_encoder.9} parent=0 // pred_check_branch
    %339 = sbr.rel (0) target = $region45
  $region44: #{v2i_transformer_encoder.9} parent=0 // pred_region
    _
  $region45: #{v2i_transformer_encoder.9} parent=0 // pred_fallthru
    _

</llo_original>
